<compile_context>
chip_gen: v6e
topology: v6e:2x2x1
jax: 0.10.0
libtpu: 0.0.40
codegen_flags: <defaults>
</compile_context>

<pallas_src>
import functools

import jax
import jax.numpy as jnp
from jax import lax
from jax.experimental import pallas as pl
from jax.experimental.pallas import tpu as pltpu

EPS = 1e-5


def _row_shift(a, dh, keep):
    """Return s with s[r] = a[r + dh] where `keep` is true (r and r+dh in the same
    H-row image), else 0.  a is a (N*H, L) lane-packed slab; dh in {-1, +1}.
    Implemented as a 1-row sublane shift (slice + concat with a zero row) plus the
    precomputed image-boundary mask."""
    zero = jnp.zeros((1, a.shape[1]), a.dtype)
    if dh == 1:
        shifted = jnp.concatenate([a[1:, :], zero], axis=0)     # shifted[r] = a[r+1]
    else:  # dh == -1
        shifted = jnp.concatenate([zero, a[:-1, :]], axis=0)    # shifted[r] = a[r-1]
    return jnp.where(keep, shifted, 0.0)


def _bn_fold(accs, gammas, betas, m_red, m_exp, inv_count):
    """Single-pass training-mode BN for a group of conv outputs, folded to per-lane
    scale/shift.  accs: list of (N*H, W*C) accumulators with channel = lane % C.
    gammas/betas: matching lists of (1, C) rows.  m_red: (W*C, C) channel-reduce
    matrix; m_exp: (C, W*C) lane-expand matrix.  Returns [(a_lane, b_lane)], each
    (1, W*C), so that BN(acc_i) = acc_i * a_lane_i + b_lane_i.  Batching the group
    keeps the tiny reduce/expand matmuls to one each."""
    n = len(accs)
    sums = jnp.concatenate(
        [jnp.sum(a, axis=0, keepdims=True) for a in accs]
        + [jnp.sum(a * a, axis=0, keepdims=True) for a in accs], axis=0)     # (2n, WC)
    moments = jnp.dot(sums, m_red, preferred_element_type=jnp.float32)       # (2n, C)
    mean = moments[:n] * inv_count                                           # (n, C)
    var = moments[n:] * inv_count - mean * mean                              # biased var
    a_c = jnp.concatenate(gammas, axis=0) * lax.rsqrt(var + EPS)             # (n, C)
    b_c = jnp.concatenate(betas, axis=0) - mean * a_c                        # (n, C)
    ab = jnp.dot(jnp.concatenate([a_c, b_c], axis=0), m_exp,
                 preferred_element_type=jnp.float32)                         # (2n, WC)
    return [(ab[i:i + 1], ab[n + i:n + i + 1]) for i in range(n)]


def resblock_kernel(x_ref, w1k0_ref, w1k1s_ref, w1k2_ref, w2_ref,
                    bnp_ref, mred_ref, mexp_ref, out_ref, *, H, inv_count):
    WC = out_ref.shape[1]                    # W * Cout (lane-dense width)

    x = x_ref[...]                           # (N*H, W*Cin)

    # Shared image-row masks (one iota + one mod, H is a power of two -> AND).
    h = lax.broadcasted_iota(jnp.int32, (x.shape[0], 1), 0) % H
    keep_up = h >= 1                         # a row above exists in the same image
    keep_dn = h < (H - 1)                    # a row below exists in the same image

    x_up = _row_shift(x, -1, keep_up)        # rows h-1 (kernel row kh=0)
    x_dn = _row_shift(x, +1, keep_dn)        # rows h+1 (kernel row kh=2)

    m_red = mred_ref[...]
    m_exp = mexp_ref[...]

    # ---- conv1 (3x3) with the 1x1 shortcut fused into the centre-row matmul ----
    ctr = jnp.dot(x, w1k1s_ref[...], preferred_element_type=jnp.float32)   # (N*H, 2*WC)
    acc1 = (ctr[:, :WC]
            + jnp.dot(x_up, w1k0_ref[...], preferred_element_type=jnp.float32)
            + jnp.dot(x_dn, w1k2_ref[...], preferred_element_type=jnp.float32))
    acc_s = ctr[:, WC:]                      # shortcut 1x1 conv output

    g1, b1 = bnp_ref[0:1, :], bnp_ref[1:2, :]
    g2, b2 = bnp_ref[2:3, :], bnp_ref[3:4, :]
    gs, bs = bnp_ref[4:5, :], bnp_ref[5:6, :]

    # BN1 and BN-shortcut batched into a single reduce/expand pair.
    (a1, c1), (a_s, c_s) = _bn_fold([acc1, acc_s], [g1, gs], [b1, bs],
                                    m_red, m_exp, inv_count)
    h1 = jnp.maximum(acc1 * a1 + c1, 0.0)    # BN1 + ReLU, stays lane-dense (N*H, WC)

    # ---- conv2 (3x3) on h1: single MXU call on the vreg-aligned lane-concat ----
    h1_up = _row_shift(h1, -1, keep_up)
    h1_dn = _row_shift(h1, +1, keep_dn)
    acc2 = jnp.dot(jnp.concatenate([h1_up, h1, h1_dn], axis=1), w2_ref[...],
                   preferred_element_type=jnp.float32)            # (N*H, WC)

    [(a2, c2)] = _bn_fold([acc2], [g2], [b2], m_red, m_exp, inv_count)

    # residual add + final ReLU, stored lane-dense (unmasked vst)
    out_ref[...] = jnp.maximum((acc2 * a2 + c2) + (acc_s * a_s + c_s), 0.0)


def _band_matrix(w_row, W):
    """Expand one kernel row (KW=3, Cin, Cout) of a 3x3 conv into the (W*Cin, W*Cout)
    banded matrix that applies the horizontal taps + channel mixing to a lane-packed
    (rows, W*Cin) slab.  Horizontal zero-padding falls out of the band structure."""
    _, Cin, Cout = w_row.shape
    wi = jnp.arange(W)[:, None]
    wo = jnp.arange(W)[None, :]
    kw = wi - wo + 1                                          # kernel column index
    valid = ((kw >= 0) & (kw <= 2)).astype(w_row.dtype)
    taps = w_row[jnp.clip(kw, 0, 2)] * valid[:, :, None, None]  # (W, W, Cin, Cout)
    return jnp.transpose(taps, (0, 2, 1, 3)).reshape(W * Cin, W * Cout)


def residual_block_small(x_nchw, params):
    """Wrapper: NCHW in / NCHW out. All conv / BN / ReLU math runs in one Pallas kernel."""
    N, Cin, H, W = x_nchw.shape
    Cout = params["w1"].shape[0]
    NH, WC = N * H, W * Cout

    # layout plumbing (glue): NCHW -> lane-packed (N*H, W*Cin) slab
    x_pack = jnp.transpose(x_nchw, (0, 2, 3, 1)).reshape(NH, W * Cin).astype(jnp.float32)

    # conv weights (OIHW -> HWIO) expanded to per-kernel-row banded matrices
    w1 = jnp.transpose(params["w1"], (2, 3, 1, 0)).astype(jnp.float32)   # (3,3,Cin,Cout)
    w2 = jnp.transpose(params["w2"], (2, 3, 1, 0)).astype(jnp.float32)   # (3,3,Cout,Cout)
    w1_k0 = _band_matrix(w1[0], W)
    w1_k1 = _band_matrix(w1[1], W)
    w1_k2 = _band_matrix(w1[2], W)
    # conv2: all three kernel rows vstacked -> one (3*W*Cout, W*Cout) matmul in-kernel
    w2_full = jnp.concatenate(
        [_band_matrix(w2[0], W), _band_matrix(w2[1], W), _band_matrix(w2[2], W)], axis=0)

    # 1x1 shortcut as a block-diagonal (W*Cin, W*Cout), fused as extra output columns
    # of the conv1 centre-row matmul.
    ws = params["ws"].reshape(Cout, Cin).T.astype(jnp.float32)           # (Cin, Cout)
    eye = jnp.eye(W, dtype=jnp.float32)
    ws_band = (eye[:, None, :, None] * ws[None, :, None, :]).reshape(W * Cin, WC)
    w1_k1s = jnp.concatenate([w1_k1, ws_band], axis=1)                   # (W*Cin, 2*WC)

    # BN channel-reduce / lane-expand matrices (channel = lane % Cout)
    lane = jnp.arange(WC)[:, None]
    m_red = (lane % Cout == jnp.arange(Cout)[None, :]).astype(jnp.float32)   # (WC, Cout)
    m_exp = m_red.T                                                          # (Cout, WC)

    bnp = jnp.stack([params["g1"], params["b1"], params["g2"], params["b2"],
                     params["gs"], params["bs"]]).astype(jnp.float32)        # (6, Cout)

    vmem = pl.BlockSpec(memory_space=pltpu.MemorySpace.VMEM)
    kernel = functools.partial(resblock_kernel, H=H, inv_count=1.0 / (N * H * W))

    # TODO(synk): at real ResNet sizes add a grid over N / H row-tiles with BlockSpec
    # pipelining, bf16 matmul operands and a two-pass cross-tile BN reduction (and
    # stride>1 support); this single-invocation design is sized for the small test shape.
    out = pl.pallas_call(
        kernel,
        out_shape=jax.ShapeDtypeStruct((NH, WC), jnp.float32),
        in_specs=[vmem] * 8,
        out_specs=vmem,
    )(x_pack, w1_k0, w1_k1s, w1_k2, w2_full, bnp, m_red, m_exp)

    # lane-dense slab -> NCHW (glue)
    return jnp.transpose(out.reshape(N, H, W, Cout), (0, 3, 1, 2))


def residual_block_small_ref(x, p):
    """Pure-JAX NCHW reference mirroring the PyTorch forward (for correctness check)."""
    def conv(x, w, pad):
        return lax.conv_general_dilated(x, w, window_strides=(1, 1),
                                        padding=((pad, pad), (pad, pad)),
                                        dimension_numbers=("NCHW", "OIHW", "NCHW"))

    def bn(x, g, b):
        m = jnp.mean(x, axis=(0, 2, 3), keepdims=True)
        v = jnp.mean((x - m) ** 2, axis=(0, 2, 3), keepdims=True)
        return (x - m) * lax.rsqrt(v + EPS) * g.reshape(1, -1, 1, 1) + b.reshape(1, -1, 1, 1)

    out = jax.nn.relu(bn(conv(x, p["w1"], 1), p["g1"], p["b1"]))
    out = bn(conv(out, p["w2"], 1), p["g2"], p["b2"])
    sc = bn(conv(x, p["ws"], 0), p["gs"], p["bs"])
    return jax.nn.relu(out + sc)


if __name__ == "__main__":
    N, Cin, Cout, H, W = 2, 4, 8, 16, 16

    key = jax.random.PRNGKey(0)
    kx, k1, k2, k3, k4, k5, k6, k7, k8, k9 = jax.random.split(key, 10)

    x = jax.random.normal(kx, (N, Cin, H, W), jnp.float32)

    params = {
        "w1": 0.2 * jax.random.normal(k1, (Cout, Cin, 3, 3), jnp.float32),
        "g1": 1.0 + 0.1 * jax.random.normal(k2, (Cout,), jnp.float32),
        "b1": 0.1 * jax.random.normal(k3, (Cout,), jnp.float32),
        "w2": 0.2 * jax.random.normal(k4, (Cout, Cout, 3, 3), jnp.float32),
        "g2": 1.0 + 0.1 * jax.random.normal(k5, (Cout,), jnp.float32),
        "b2": 0.1 * jax.random.normal(k6, (Cout,), jnp.float32),
        "ws": 0.2 * jax.random.normal(k7, (Cout, Cin, 1, 1), jnp.float32),
        "gs": 1.0 + 0.1 * jax.random.normal(k8, (Cout,), jnp.float32),
        "bs": 0.1 * jax.random.normal(k9, (Cout,), jnp.float32),
    }

    out = jax.jit(residual_block_small)(x, params)
    out = jax.block_until_ready(out)

    ref = jax.block_until_ready(residual_block_small_ref(x, params))
    assert out.shape == (N, Cout, H, W), out.shape
    assert jnp.allclose(out, ref, atol=1e-2, rtol=1e-2), float(jnp.max(jnp.abs(out - ref)))

    print("KERNEL_OK")
</pallas_src>

<mosaic_0001>
module attributes {stable_mosaic.version = 11 : i64} {
  func.func @resblock_kernel(%arg0: memref<32x64xf32, #tpu.memory_space<vmem>>, %arg1: memref<64x128xf32, #tpu.memory_space<vmem>>, %arg2: memref<64x256xf32, #tpu.memory_space<vmem>>, %arg3: memref<64x128xf32, #tpu.memory_space<vmem>>, %arg4: memref<384x128xf32, #tpu.memory_space<vmem>>, %arg5: memref<6x8xf32, #tpu.memory_space<vmem>>, %arg6: memref<128x8xf32, #tpu.memory_space<vmem>>, %arg7: memref<8x128xf32, #tpu.memory_space<vmem>>, %arg8: memref<32x128xf32, #tpu.memory_space<vmem>>) attributes {dimension_semantics = [], scalar_prefetch = 0 : i64, scratch_operands = 0 : i64, tpu.core_type = #tpu.core_type<tc>} {
    %c0 = arith.constant 0 : index
    %c0_0 = arith.constant 0 : index
    %0 = vector.load %arg0[%c0, %c0_0] : memref<32x64xf32, #tpu.memory_space<vmem>>, vector<32x64xf32>
    %1 = tpu.iota {dimensions = array<i32: 0>} : vector<32x1xi32>
    %c16_i32 = arith.constant 16 : i32
    %c0_i32 = arith.constant 0 : i32
    %2 = arith.cmpi eq, %c16_i32, %c0_i32 : i32
    %c1_i32 = arith.constant 1 : i32
    %3 = arith.select %2, %c1_i32, %c16_i32 : i32
    %4 = vector.broadcast %3 : i32 to vector<32x1xi32>
    %5 = arith.remsi %1, %4 : vector<32x1xi32>
    %c0_i32_1 = arith.constant 0 : i32
    %6 = vector.broadcast %c0_i32_1 : i32 to vector<32x1xi32>
    %7 = arith.cmpi ne, %5, %6 : vector<32x1xi32>
    %c0_i32_2 = arith.constant 0 : i32
    %8 = vector.broadcast %c0_i32_2 : i32 to vector<32x1xi32>
    %9 = arith.cmpi slt, %5, %8 : vector<32x1xi32>
    %c0_i32_3 = arith.constant 0 : i32
    %10 = arith.cmpi slt, %3, %c0_i32_3 : i32
    %11 = vector.broadcast %10 : i1 to vector<32x1xi1>
    %12 = vector.broadcast %11 : vector<32x1xi1> to vector<32x1xi1>
    %13 = arith.xori %9, %12 : vector<32x1xi1>
    %14 = arith.andi %13, %7 : vector<32x1xi1>
    %15 = vector.broadcast %3 : i32 to vector<32x1xi32>
    %16 = arith.addi %5, %15 : vector<32x1xi32>
    %17 = arith.select %14, %16, %5 : vector<32x1xi1>, vector<32x1xi32>
    %c1_i32_4 = arith.constant 1 : i32
    %18 = vector.broadcast %c1_i32_4 : i32 to vector<32x1xi32>
    %19 = arith.cmpi sge, %17, %18 : vector<32x1xi32>
    %c15_i32 = arith.constant 15 : i32
    %20 = vector.broadcast %c15_i32 : i32 to vector<32x1xi32>
    %21 = arith.cmpi slt, %17, %20 : vector<32x1xi32>
    %cst = arith.constant 0.000000e+00 : f32
    %22 = vector.broadcast %cst : f32 to vector<1x64xf32>
    %23 = vector.extract_strided_slice %0 {offsets = [0, 0], sizes = [31, 64], strides = [1, 1]} : vector<32x64xf32> to vector<31x64xf32>
    %24 = tpu.concatenate %22, %23 in 0 : vector<1x64xf32>, vector<31x64xf32> -> vector<32x64xf32>
    %cst_5 = arith.constant 0.000000e+00 : f32
    %25 = vector.shape_cast %19 : vector<32x1xi1> to vector<32x1xi1>
    %26 = vector.broadcast %25 : vector<32x1xi1> to vector<32x64xi1>
    %27 = vector.broadcast %cst_5 : f32 to vector<32x64xf32>
    %28 = arith.select %26, %24, %27 : vector<32x64xi1>, vector<32x64xf32>
    %cst_6 = arith.constant 0.000000e+00 : f32
    %29 = vector.broadcast %cst_6 : f32 to vector<1x64xf32>
    %30 = vector.extract_strided_slice %0 {offsets = [1, 0], sizes = [31, 64], strides = [1, 1]} : vector<32x64xf32> to vector<31x64xf32>
    %31 = tpu.concatenate %30, %29 in 0 : vector<31x64xf32>, vector<1x64xf32> -> vector<32x64xf32>
    %cst_7 = arith.constant 0.000000e+00 : f32
    %32 = vector.shape_cast %21 : vector<32x1xi1> to vector<32x1xi1>
    %33 = vector.broadcast %32 : vector<32x1xi1> to vector<32x64xi1>
    %34 = vector.broadcast %cst_7 : f32 to vector<32x64xf32>
    %35 = arith.select %33, %31, %34 : vector<32x64xi1>, vector<32x64xf32>
    %c0_8 = arith.constant 0 : index
    %c0_9 = arith.constant 0 : index
    %36 = vector.load %arg6[%c0_8, %c0_9] : memref<128x8xf32, #tpu.memory_space<vmem>>, vector<128x8xf32>
    %c0_10 = arith.constant 0 : index
    %c0_11 = arith.constant 0 : index
    %37 = vector.load %arg7[%c0_10, %c0_11] : memref<8x128xf32, #tpu.memory_space<vmem>>, vector<8x128xf32>
    %c0_12 = arith.constant 0 : index
    %c0_13 = arith.constant 0 : index
    %38 = vector.load %arg2[%c0_12, %c0_13] : memref<64x256xf32, #tpu.memory_space<vmem>>, vector<64x256xf32>
    %cst_14 = arith.constant dense<0.000000e+00> : vector<32x256xf32>
    %39 = tpu.matmul %0, %38, %cst_14 {dimension_numbers = #tpu.dot_dimension_numbers<[1], [0], [0], [1], [0, 0, 1, 1], [], []>} : vector<32x64xf32>, vector<64x256xf32>, vector<32x256xf32> -> vector<32x256xf32>
    %40 = vector.extract_strided_slice %39 {offsets = [0, 0], sizes = [32, 128], strides = [1, 1]} : vector<32x256xf32> to vector<32x128xf32>
    %c0_15 = arith.constant 0 : index
    %c0_16 = arith.constant 0 : index
    %41 = vector.load %arg1[%c0_15, %c0_16] : memref<64x128xf32, #tpu.memory_space<vmem>>, vector<64x128xf32>
    %cst_17 = arith.constant dense<0.000000e+00> : vector<32x128xf32>
    %42 = tpu.matmul %28, %41, %cst_17 {dimension_numbers = #tpu.dot_dimension_numbers<[1], [0], [0], [1], [0, 0, 1, 1], [], []>} : vector<32x64xf32>, vector<64x128xf32>, vector<32x128xf32> -> vector<32x128xf32>
    %43 = arith.addf %40, %42 : vector<32x128xf32>
    %c0_18 = arith.constant 0 : index
    %c0_19 = arith.constant 0 : index
    %44 = vector.load %arg3[%c0_18, %c0_19] : memref<64x128xf32, #tpu.memory_space<vmem>>, vector<64x128xf32>
    %cst_20 = arith.constant dense<0.000000e+00> : vector<32x128xf32>
    %45 = tpu.matmul %35, %44, %cst_20 {dimension_numbers = #tpu.dot_dimension_numbers<[1], [0], [0], [1], [0, 0, 1, 1], [], []>} : vector<32x64xf32>, vector<64x128xf32>, vector<32x128xf32> -> vector<32x128xf32>
    %46 = arith.addf %43, %45 : vector<32x128xf32>
    %47 = vector.extract_strided_slice %39 {offsets = [0, 128], sizes = [32, 128], strides = [1, 1]} : vector<32x256xf32> to vector<32x128xf32>
    %c0_21 = arith.constant 0 : index
    %c0_22 = arith.constant 0 : index
    %48 = vector.load %arg5[%c0_21, %c0_22] : memref<6x8xf32, #tpu.memory_space<vmem>>, vector<1x8xf32>
    %c1 = arith.constant 1 : index
    %c0_23 = arith.constant 0 : index
    %49 = vector.load %arg5[%c1, %c0_23] : memref<6x8xf32, #tpu.memory_space<vmem>>, vector<1x8xf32>
    %c2 = arith.constant 2 : index
    %c0_24 = arith.constant 0 : index
    %50 = vector.load %arg5[%c2, %c0_24] : memref<6x8xf32, #tpu.memory_space<vmem>>, vector<1x8xf32>
    %c3 = arith.constant 3 : index
    %c0_25 = arith.constant 0 : index
    %51 = vector.load %arg5[%c3, %c0_25] : memref<6x8xf32, #tpu.memory_space<vmem>>, vector<1x8xf32>
    %c4 = arith.constant 4 : index
    %c0_26 = arith.constant 0 : index
    %52 = vector.load %arg5[%c4, %c0_26] : memref<6x8xf32, #tpu.memory_space<vmem>>, vector<1x8xf32>
    %c5 = arith.constant 5 : index
    %c0_27 = arith.constant 0 : index
    %53 = vector.load %arg5[%c5, %c0_27] : memref<6x8xf32, #tpu.memory_space<vmem>>, vector<1x8xf32>
    %cst_28 = arith.constant dense<0.000000e+00> : vector<128xf32>
    %54 = vector.multi_reduction <add>, %46, %cst_28 [0] : vector<32x128xf32> to vector<128xf32>
    %55 = vector.shape_cast %54 : vector<128xf32> to vector<1x128xf32>
    %cst_29 = arith.constant dense<0.000000e+00> : vector<128xf32>
    %56 = vector.multi_reduction <add>, %47, %cst_29 [0] : vector<32x128xf32> to vector<128xf32>
    %57 = vector.shape_cast %56 : vector<128xf32> to vector<1x128xf32>
    %58 = arith.mulf %46, %46 : vector<32x128xf32>
    %cst_30 = arith.constant dense<0.000000e+00> : vector<128xf32>
    %59 = vector.multi_reduction <add>, %58, %cst_30 [0] : vector<32x128xf32> to vector<128xf32>
    %60 = vector.shape_cast %59 : vector<128xf32> to vector<1x128xf32>
    %61 = arith.mulf %47, %47 : vector<32x128xf32>
    %cst_31 = arith.constant dense<0.000000e+00> : vector<128xf32>
    %62 = vector.multi_reduction <add>, %61, %cst_31 [0] : vector<32x128xf32> to vector<128xf32>
    %63 = vector.shape_cast %62 : vector<128xf32> to vector<1x128xf32>
    %64 = tpu.concatenate %55, %57, %60, %63 in 0 : vector<1x128xf32>, vector<1x128xf32>, vector<1x128xf32>, vector<1x128xf32> -> vector<4x128xf32>
    %cst_32 = arith.constant dense<0.000000e+00> : vector<4x8xf32>
    %65 = tpu.matmul %64, %36, %cst_32 {dimension_numbers = #tpu.dot_dimension_numbers<[1], [0], [0], [1], [0, 0, 1, 1], [], []>} : vector<4x128xf32>, vector<128x8xf32>, vector<4x8xf32> -> vector<4x8xf32>
    %66 = vector.extract_strided_slice %65 {offsets = [0, 0], sizes = [2, 8], strides = [1, 1]} : vector<4x8xf32> to vector<2x8xf32>
    %cst_33 = arith.constant 0.001953125 : f32
    %67 = vector.broadcast %cst_33 : f32 to vector<2x8xf32>
    %68 = arith.mulf %66, %67 : vector<2x8xf32>
    %69 = vector.extract_strided_slice %65 {offsets = [2, 0], sizes = [2, 8], strides = [1, 1]} : vector<4x8xf32> to vector<2x8xf32>
    %cst_34 = arith.constant 0.001953125 : f32
    %70 = vector.broadcast %cst_34 : f32 to vector<2x8xf32>
    %71 = arith.mulf %69, %70 : vector<2x8xf32>
    %72 = arith.mulf %68, %68 : vector<2x8xf32>
    %73 = arith.subf %71, %72 : vector<2x8xf32>
    %74 = tpu.concatenate %48, %52 in 0 : vector<1x8xf32>, vector<1x8xf32> -> vector<2x8xf32>
    %cst_35 = arith.constant 9.99999974E-6 : f32
    %75 = vector.broadcast %cst_35 : f32 to vector<2x8xf32>
    %76 = arith.addf %73, %75 : vector<2x8xf32>
    %77 = math.rsqrt %76 : vector<2x8xf32>
    %78 = arith.mulf %74, %77 : vector<2x8xf32>
    %79 = tpu.concatenate %49, %53 in 0 : vector<1x8xf32>, vector<1x8xf32> -> vector<2x8xf32>
    %80 = arith.mulf %68, %78 : vector<2x8xf32>
    %81 = arith.subf %79, %80 : vector<2x8xf32>
    %82 = tpu.concatenate %78, %81 in 0 : vector<2x8xf32>, vector<2x8xf32> -> vector<4x8xf32>
    %cst_36 = arith.constant dense<0.000000e+00> : vector<4x128xf32>
    %83 = tpu.matmul %82, %37, %cst_36 {dimension_numbers = #tpu.dot_dimension_numbers<[1], [0], [0], [1], [0, 0, 1, 1], [], []>} : vector<4x8xf32>, vector<8x128xf32>, vector<4x128xf32> -> vector<4x128xf32>
    %84 = vector.extract_strided_slice %83 {offsets = [0, 0], sizes = [1, 128], strides = [1, 1]} : vector<4x128xf32> to vector<1x128xf32>
    %85 = vector.extract_strided_slice %83 {offsets = [2, 0], sizes = [1, 128], strides = [1, 1]} : vector<4x128xf32> to vector<1x128xf32>
    %86 = vector.extract_strided_slice %83 {offsets = [1, 0], sizes = [1, 128], strides = [1, 1]} : vector<4x128xf32> to vector<1x128xf32>
    %87 = vector.extract_strided_slice %83 {offsets = [3, 0], sizes = [1, 128], strides = [1, 1]} : vector<4x128xf32> to vector<1x128xf32>
    %88 = vector.broadcast %84 : vector<1x128xf32> to vector<32x128xf32>
    %89 = arith.mulf %46, %88 : vector<32x128xf32>
    %90 = vector.broadcast %85 : vector<1x128xf32> to vector<32x128xf32>
    %91 = arith.addf %89, %90 : vector<32x128xf32>
    %cst_37 = arith.constant 0.000000e+00 : f32
    %92 = vector.broadcast %cst_37 : f32 to vector<32x128xf32>
    %93 = arith.maximumf %91, %92 : vector<32x128xf32>
    %cst_38 = arith.constant 0.000000e+00 : f32
    %94 = vector.broadcast %cst_38 : f32 to vector<1x128xf32>
    %95 = vector.extract_strided_slice %93 {offsets = [0, 0], sizes = [31, 128], strides = [1, 1]} : vector<32x128xf32> to vector<31x128xf32>
    %96 = tpu.concatenate %94, %95 in 0 : vector<1x128xf32>, vector<31x128xf32> -> vector<32x128xf32>
    %cst_39 = arith.constant 0.000000e+00 : f32
    %97 = vector.shape_cast %19 : vector<32x1xi1> to vector<32x1xi1>
    %98 = vector.broadcast %97 : vector<32x1xi1> to vector<32x128xi1>
    %99 = vector.broadcast %cst_39 : f32 to vector<32x128xf32>
    %100 = arith.select %98, %96, %99 : vector<32x128xi1>, vector<32x128xf32>
    %cst_40 = arith.constant 0.000000e+00 : f32
    %101 = vector.broadcast %cst_40 : f32 to vector<1x128xf32>
    %102 = vector.extract_strided_slice %93 {offsets = [1, 0], sizes = [31, 128], strides = [1, 1]} : vector<32x128xf32> to vector<31x128xf32>
    %103 = tpu.concatenate %102, %101 in 0 : vector<31x128xf32>, vector<1x128xf32> -> vector<32x128xf32>
    %cst_41 = arith.constant 0.000000e+00 : f32
    %104 = vector.shape_cast %21 : vector<32x1xi1> to vector<32x1xi1>
    %105 = vector.broadcast %104 : vector<32x1xi1> to vector<32x128xi1>
    %106 = vector.broadcast %cst_41 : f32 to vector<32x128xf32>
    %107 = arith.select %105, %103, %106 : vector<32x128xi1>, vector<32x128xf32>
    %108 = tpu.concatenate %100, %93, %107 in 1 : vector<32x128xf32>, vector<32x128xf32>, vector<32x128xf32> -> vector<32x384xf32>
    %c0_42 = arith.constant 0 : index
    %c0_43 = arith.constant 0 : index
    %109 = vector.load %arg4[%c0_42, %c0_43] : memref<384x128xf32, #tpu.memory_space<vmem>>, vector<384x128xf32>
    %cst_44 = arith.constant dense<0.000000e+00> : vector<32x128xf32>
    %110 = tpu.matmul %108, %109, %cst_44 {dimension_numbers = #tpu.dot_dimension_numbers<[1], [0], [0], [1], [0, 0, 1, 1], [], []>} : vector<32x384xf32>, vector<384x128xf32>, vector<32x128xf32> -> vector<32x128xf32>
    %cst_45 = arith.constant dense<0.000000e+00> : vector<128xf32>
    %111 = vector.multi_reduction <add>, %110, %cst_45 [0] : vector<32x128xf32> to vector<128xf32>
    %112 = vector.shape_cast %111 : vector<128xf32> to vector<1x128xf32>
    %113 = arith.mulf %110, %110 : vector<32x128xf32>
    %cst_46 = arith.constant dense<0.000000e+00> : vector<128xf32>
    %114 = vector.multi_reduction <add>, %113, %cst_46 [0] : vector<32x128xf32> to vector<128xf32>
    %115 = vector.shape_cast %114 : vector<128xf32> to vector<1x128xf32>
    %116 = tpu.concatenate %112, %115 in 0 : vector<1x128xf32>, vector<1x128xf32> -> vector<2x128xf32>
    %cst_47 = arith.constant dense<0.000000e+00> : vector<2x8xf32>
    %117 = tpu.matmul %116, %36, %cst_47 {dimension_numbers = #tpu.dot_dimension_numbers<[1], [0], [0], [1], [0, 0, 1, 1], [], []>} : vector<2x128xf32>, vector<128x8xf32>, vector<2x8xf32> -> vector<2x8xf32>
    %118 = vector.extract_strided_slice %117 {offsets = [0, 0], sizes = [1, 8], strides = [1, 1]} : vector<2x8xf32> to vector<1x8xf32>
    %cst_48 = arith.constant 0.001953125 : f32
    %119 = vector.broadcast %cst_48 : f32 to vector<1x8xf32>
    %120 = arith.mulf %118, %119 : vector<1x8xf32>
    %121 = vector.extract_strided_slice %117 {offsets = [1, 0], sizes = [1, 8], strides = [1, 1]} : vector<2x8xf32> to vector<1x8xf32>
    %cst_49 = arith.constant 0.001953125 : f32
    %122 = vector.broadcast %cst_49 : f32 to vector<1x8xf32>
    %123 = arith.mulf %121, %122 : vector<1x8xf32>
    %124 = arith.mulf %120, %120 : vector<1x8xf32>
    %125 = arith.subf %123, %124 : vector<1x8xf32>
    %cst_50 = arith.constant 9.99999974E-6 : f32
    %126 = vector.broadcast %cst_50 : f32 to vector<1x8xf32>
    %127 = arith.addf %125, %126 : vector<1x8xf32>
    %128 = math.rsqrt %127 : vector<1x8xf32>
    %129 = arith.mulf %50, %128 : vector<1x8xf32>
    %130 = arith.mulf %120, %129 : vector<1x8xf32>
    %131 = arith.subf %51, %130 : vector<1x8xf32>
    %132 = tpu.concatenate %129, %131 in 0 : vector<1x8xf32>, vector<1x8xf32> -> vector<2x8xf32>
    %cst_51 = arith.constant dense<0.000000e+00> : vector<2x128xf32>
    %133 = tpu.matmul %132, %37, %cst_51 {dimension_numbers = #tpu.dot_dimension_numbers<[1], [0], [0], [1], [0, 0, 1, 1], [], []>} : vector<2x8xf32>, vector<8x128xf32>, vector<2x128xf32> -> vector<2x128xf32>
    %134 = vector.extract_strided_slice %133 {offsets = [0, 0], sizes = [1, 128], strides = [1, 1]} : vector<2x128xf32> to vector<1x128xf32>
    %135 = vector.extract_strided_slice %133 {offsets = [1, 0], sizes = [1, 128], strides = [1, 1]} : vector<2x128xf32> to vector<1x128xf32>
    %136 = vector.broadcast %134 : vector<1x128xf32> to vector<32x128xf32>
    %137 = arith.mulf %110, %136 : vector<32x128xf32>
    %138 = vector.broadcast %135 : vector<1x128xf32> to vector<32x128xf32>
    %139 = arith.addf %137, %138 : vector<32x128xf32>
    %140 = vector.broadcast %86 : vector<1x128xf32> to vector<32x128xf32>
    %141 = arith.mulf %47, %140 : vector<32x128xf32>
    %142 = vector.broadcast %87 : vector<1x128xf32> to vector<32x128xf32>
    %143 = arith.addf %141, %142 : vector<32x128xf32>
    %144 = arith.addf %139, %143 : vector<32x128xf32>
    %cst_52 = arith.constant 0.000000e+00 : f32
    %145 = vector.broadcast %cst_52 : f32 to vector<32x128xf32>
    %146 = arith.maximumf %144, %145 : vector<32x128xf32>
    %c0_53 = arith.constant 0 : index
    %c0_54 = arith.constant 0 : index
    %147 = vector.load %arg8[%c0_53, %c0_54] : memref<32x128xf32, #tpu.memory_space<vmem>>, vector<32x128xf32>
    tpu.vector_store %arg8[%c0_53, %c0_54], %146 {strides = array<i32>} : memref<32x128xf32, #tpu.memory_space<vmem>>, vector<32x128xf32>,
    return
  }
}

</mosaic_0001>

<llo_original>
// kernel: residual_block_small.1
$region0: #{residual_block_small.1}
  #allocation0 [shape = 'u32[]', space=smem, size = 0x4, offset = 0x4, fixed_abs, tag = 'smem constant byte address 0x4 - core index']
  #allocation1 [shape = 'u32[144,128]{1,0:T(1,128)}', space=vmem, size = 0x12000, scoped, tag = 'internal scratch']
  %s0 = inlined_call_operand.vmem [shape: f32[32,64], index: 0, kind: input, shape index: {}]
  %s1 = inlined_call_operand.vmem [shape: f32[64,128], index: 1, kind: input, shape index: {}]
  %s2 = inlined_call_operand.vmem [shape: f32[64,256], index: 2, kind: input, shape index: {}]
  %s3 = inlined_call_operand.vmem [shape: f32[64,128], index: 3, kind: input, shape index: {}]
  %s4 = inlined_call_operand.vmem [shape: f32[384,128], index: 4, kind: input, shape index: {}]
  %s5 = inlined_call_operand.vmem [shape: f32[6,8], index: 5, kind: input, shape index: {}]
  %s6 = inlined_call_operand.vmem [shape: f32[128,8], index: 6, kind: input, shape index: {}]
  %s7 = inlined_call_operand.vmem [shape: f32[8,128], index: 7, kind: input, shape index: {}]
  %s8 = inlined_call_operand.vmem [shape: f32[32,128], index: 8, kind: output, shape index: {}]
  %s9 = sld [smem:[#allocation0]]
  $region42: #{residual_block_small.1} parent=0
    _
  %s11 = ssub.s32 1, %s9
  %s12 = scalar_select 0, %s11, %s9
  // Predicated region
  $region2: #{residual_block_small.1} parent=0 // pred_check
    _
  $region3: #{residual_block_small.1} parent=0 // pred_check_branch
    %14 = sbr.rel (0) target = $region5
  $region4: #{residual_block_small.1} parent=0 // pred_region
    _
  $region5: #{residual_block_small.1} parent=0 // pred_fallthru
    _
  // Predicated region
  $region6: #{residual_block_small.1} parent=0 // pred_check
    _
  $region7: #{residual_block_small.1} parent=0 // pred_check_branch
    %16 = sbr.rel (0) target = $region9
  $region8: #{residual_block_small.1} parent=0 // pred_region
    _
  $region9: #{residual_block_small.1} parent=0 // pred_fallthru
    _
  // Predicated region
  $region10: #{residual_block_small.1} parent=0 // pred_check
    _
  $region11: #{residual_block_small.1} parent=0 // pred_check_branch
    %18 = sbr.rel (0) target = $region13
  $region12: #{residual_block_small.1} parent=0 // pred_region
    _
  $region13: #{residual_block_small.1} parent=0 // pred_fallthru
    _
  // Predicated region
  $region14: #{residual_block_small.1} parent=0 // pred_check
    _
  $region15: #{residual_block_small.1} parent=0 // pred_check_branch
    %20 = sbr.rel (0) target = $region17
  $region16: #{residual_block_small.1} parent=0 // pred_region
    _
  $region17: #{residual_block_small.1} parent=0 // pred_fallthru
    _
  // Predicated region
  $region18: #{residual_block_small.1} parent=0 // pred_check
    _
  $region19: #{residual_block_small.1} parent=0 // pred_check_branch
    %22 = sbr.rel (0) target = $region21
  $region20: #{residual_block_small.1} parent=0 // pred_region
    _
  $region21: #{residual_block_small.1} parent=0 // pred_fallthru
    _
  // Predicated region
  $region22: #{residual_block_small.1} parent=0 // pred_check
    _
  $region23: #{residual_block_small.1} parent=0 // pred_check_branch
    %24 = sbr.rel (0) target = $region25
  $region24: #{residual_block_small.1} parent=0 // pred_region
    _
  $region25: #{residual_block_small.1} parent=0 // pred_fallthru
    _
  // Predicated region
  $region26: #{residual_block_small.1} parent=0 // pred_check
    _
  $region27: #{residual_block_small.1} parent=0 // pred_check_branch
    %26 = sbr.rel (0) target = $region29
  $region28: #{residual_block_small.1} parent=0 // pred_region
    _
  $region29: #{residual_block_small.1} parent=0 // pred_fallthru
    _
  // Predicated region
  $region30: #{residual_block_small.1} parent=0 // pred_check
    _
  $region31: #{residual_block_small.1} parent=0 // pred_check_branch
    %28 = sbr.rel (0) target = $region33
  $region32: #{residual_block_small.1} parent=0 // pred_region
    _
  $region33: #{residual_block_small.1} parent=0 // pred_fallthru
    _
  %v29 = vld [vmem:[%s0] sm:$0xff]
  %v30 = vld [vmem:[%s0 + $0x8] sm:$0xff]
  %v31 = vld [vmem:[%s0 + $0x10] sm:$0xff]
  %v32 = vld [vmem:[%s0 + $0x18] sm:$0xff]
  %v33 = vlaneseq
  %v34 = vshrl.u32 %v33, 7
  %v35 = vadd.s32 %v34, 8
  %v36 = vadd.s32 %v34, 16
  %v37 = vadd.s32 %v34, 24
  %vm38 = vcmp.lt.s32.totalorder %v34, 0
  %v39 = vsub.s32 0, %v34
  %v40 = vsel %vm38, %v39, %v34
  %v41 = vshrl.u32 %v40, 4
  %v42 = vand.u32 %v40, 15
  %v43 = vsub.s32 0, %v42
  %v44 = vsel %vm38, %v43, %v42
  %vm45 = vcmp.lt.s32.totalorder %v35, 0
  %v46 = vsub.s32 0, %v35
  %v47 = vsel %vm45, %v46, %v35
  %v48 = vshrl.u32 %v47, 4
  %v49 = vand.u32 %v47, 15
  %v50 = vsub.s32 0, %v49
  %v51 = vsel %vm45, %v50, %v49
  %vm52 = vcmp.lt.s32.totalorder %v36, 0
  %v53 = vsub.s32 0, %v36
  %v54 = vsel %vm52, %v53, %v36
  %v55 = vshrl.u32 %v54, 4
  %v56 = vand.u32 %v54, 15
  %v57 = vsub.s32 0, %v56
  %v58 = vsel %vm52, %v57, %v56
  %vm59 = vcmp.lt.s32.totalorder %v37, 0
  %v60 = vsub.s32 0, %v37
  %v61 = vsel %vm59, %v60, %v37
  %v62 = vshrl.u32 %v61, 4
  %v63 = vand.u32 %v61, 15
  %v64 = vsub.s32 0, %v63
  %v65 = vsel %vm59, %v64, %v63
  %vm66 = vcmp.ne.s32.totalorder %v44, 0
  %vm67 = vcmp.ne.s32.totalorder %v51, 0
  %vm68 = vcmp.ne.s32.totalorder %v58, 0
  %vm69 = vcmp.ne.s32.totalorder %v65, 0
  %vm70 = vcmp.lt.s32.totalorder %v44, 0
  %vm71 = vcmp.lt.s32.totalorder %v51, 0
  %vm72 = vcmp.lt.s32.totalorder %v58, 0
  %vm73 = vcmp.lt.s32.totalorder %v65, 0
  %vm74 = vmand %vm70, %vm66
  %vm75 = vmand %vm71, %vm67
  %vm76 = vmand %vm72, %vm68
  %vm77 = vmand %vm73, %vm69
  %v78 = vadd.s32 %v44, 16
  %v79 = vadd.s32 %v51, 16
  %v80 = vadd.s32 %v58, 16
  %v81 = vadd.s32 %v65, 16
  %v82 = vsel %vm74, %v78, %v44
  %v83 = vsel %vm75, %v79, %v51
  %v84 = vsel %vm76, %v80, %v58
  %v85 = vsel %vm77, %v81, %v65
  %vm86 = vcmp.ge.s32.totalorder %v82, 1
  %vm87 = vcmp.ge.s32.totalorder %v83, 1
  %vm88 = vcmp.ge.s32.totalorder %v84, 1
  %vm89 = vcmp.ge.s32.totalorder %v85, 1
  %vm90 = vcmp.lt.s32.totalorder %v82, 15
  %vm91 = vcmp.lt.s32.totalorder %v83, 15
  %vm92 = vcmp.lt.s32.totalorder %v84, 15
  %vm93 = vcmp.lt.s32.totalorder %v85, 15
  %vm98 = vcmask 1040384
  %v99 = vrot.slane %v29, 7
  %v100 = vrot.slane %v30, 7
  %v101 = vsel %vm98, %v99, %v100
  %v102 = vrot.slane %v31, 7
  %v103 = vsel %vm98, %v100, %v102
  %v104 = vrot.slane %v32, 7
  %v105 = vsel %vm98, %v102, %v104
  %v110 = vsel %vm98, 0.0, %v99
  %v111 = vsel %vm86, 1, 0
  %v112 = vsel %vm87, 1, 0
  %v113 = vsel %vm88, 1, 0
  %v114 = vsel %vm89, 1, 0
  %vm115 = vcmp.eq.s32.totalorder %v111, 1
  %vm116 = vcmp.eq.s32.totalorder %v112, 1
  %vm117 = vcmp.eq.s32.totalorder %v113, 1
  %vm118 = vcmp.eq.s32.totalorder %v114, 1
  %v119 = vsel %vm115, %v110, 0.0
  %v120 = vsel %vm116, %v101, 0.0
  %v121 = vsel %vm117, %v103, 0.0
  %v122 = vsel %vm118, %v105, 0.0
  %vm123 = vcmask 1046528
  %v124 = vrot.slane %v29, 1
  %v125 = vrot.slane %v30, 1
  %v126 = vsel %vm123, %v124, %v125
  %v127 = vrot.slane %v31, 1
  %v128 = vsel %vm123, %v125, %v127
  %v129 = vrot.slane %v32, 1
  %v130 = vsel %vm123, %v127, %v129
  %v135 = vsel %vm123, %v129, 0.0
  %v136 = vsel %vm90, 1, 0
  %v137 = vsel %vm91, 1, 0
  %v138 = vsel %vm92, 1, 0
  %v139 = vsel %vm93, 1, 0
  %vm140 = vcmp.eq.s32.totalorder %v136, 1
  %vm141 = vcmp.eq.s32.totalorder %v137, 1
  %vm142 = vcmp.eq.s32.totalorder %v138, 1
  %vm143 = vcmp.eq.s32.totalorder %v139, 1
  %v144 = vsel %vm140, %v126, 0.0
  %v145 = vsel %vm141, %v128, 0.0
  %v146 = vsel %vm142, %v130, 0.0
  %v147 = vsel %vm143, %v135, 0.0
  %v148 = vld [vmem:[%s6] sm:$0xff]
  %v149 = vld [vmem:[%s6 + $0x8] sm:$0xff]
  %v150 = vld [vmem:[%s6 + $0x10] sm:$0xff]
  %v151 = vld [vmem:[%s6 + $0x18] sm:$0xff]
  %v152 = vld [vmem:[%s6 + $0x20] sm:$0xff]
  %v153 = vld [vmem:[%s6 + $0x28] sm:$0xff]
  %v154 = vld [vmem:[%s6 + $0x30] sm:$0xff]
  %v155 = vld [vmem:[%s6 + $0x38] sm:$0xff]
  %v156 = vld [vmem:[%s6 + $0x40] sm:$0xff]
  %v157 = vld [vmem:[%s6 + $0x48] sm:$0xff]
  %v158 = vld [vmem:[%s6 + $0x50] sm:$0xff]
  %v159 = vld [vmem:[%s6 + $0x58] sm:$0xff]
  %v160 = vld [vmem:[%s6 + $0x60] sm:$0xff]
  %v161 = vld [vmem:[%s6 + $0x68] sm:$0xff]
  %v162 = vld [vmem:[%s6 + $0x70] sm:$0xff]
  %v163 = vld [vmem:[%s6 + $0x78] sm:$0xff]
  %v164 = vld [vmem:[%s7] sm:$0xff]
  %v165 = vld [vmem:[%s2] sm:$0xff]
  %v166 = vld [vmem:[%s2 + $0x8] sm:$0xff]
  %v167 = vld [vmem:[%s2 + $0x10] sm:$0xff]
  %v168 = vld [vmem:[%s2 + $0x18] sm:$0xff]
  %v169 = vld [vmem:[%s2 + $0x20] sm:$0xff]
  %v170 = vld [vmem:[%s2 + $0x28] sm:$0xff]
  %v171 = vld [vmem:[%s2 + $0x30] sm:$0xff]
  %v172 = vld [vmem:[%s2 + $0x38] sm:$0xff]
  %v173 = vld [vmem:[%s2 + $0x40] sm:$0xff]
  %v174 = vld [vmem:[%s2 + $0x48] sm:$0xff]
  %v175 = vld [vmem:[%s2 + $0x50] sm:$0xff]
  %v176 = vld [vmem:[%s2 + $0x58] sm:$0xff]
  %v177 = vld [vmem:[%s2 + $0x60] sm:$0xff]
  %v178 = vld [vmem:[%s2 + $0x68] sm:$0xff]
  %v179 = vld [vmem:[%s2 + $0x70] sm:$0xff]
  %v180 = vld [vmem:[%s2 + $0x78] sm:$0xff]
  %vm181 = vcmask 523264
  %v182 = vsel %vm181, %v29, 0
  %v184 = vsel %vm181, %v30, 0
  %v186 = vsel %vm181, %v31, 0
  %v188 = vsel %vm181, %v32, 0
  %190 = vmatprep.subr.mxu0 0.0
  %191 = vmatpush1.msra.mxu0 0.0
  %192 = vmatprep.subr.mxu0 0.0
  %193 = vmatpush1.msra.mxu0 0.0
  %194 = vmatprep.subr.mxu0 0.0
  %195 = vmatpush1.msra.mxu0 0.0
  %196 = vmatprep.subr.mxu0 0.0
  %197 = vmatpush1.msra.mxu0 0.0
  %198 = vmatprep.subr.mxu0 0.0
  %199 = vmatpush1.msra.mxu0 0.0
  %200 = vmatprep.subr.mxu0 0.0
  %201 = vmatpush1.msra.mxu0 0.0
  %202 = vmatprep.subr.mxu0 0.0
  %203 = vmatpush1.msra.mxu0 0.0
  %204 = vmatprep.subr.mxu0 0.0
  %205 = vmatpush1.msra.mxu0 0.0
  %206 = vmatprep.subr.mxu0 %v180
  %207 = vmatpush1.msra.mxu0 %v179
  %208 = vmatprep.subr.mxu0 %v178
  %209 = vmatpush1.msra.mxu0 %v177
  %210 = vmatprep.subr.mxu0 %v176
  %211 = vmatpush1.msra.mxu0 %v175
  %212 = vmatprep.subr.mxu0 %v174
  %213 = vmatpush1.msra.mxu0 %v173
  %214 = vmatprep.subr.mxu0 %v172
  %215 = vmatpush1.msra.mxu0 %v171
  %216 = vmatprep.subr.mxu0 %v170
  %217 = vmatpush1.msra.mxu0 %v169
  %218 = vmatprep.subr.mxu0 %v168
  %219 = vmatpush1.msra.mxu0 %v167
  %220 = vmatprep.subr.mxu0 %v166
  %221 = vmatpush1.msra.mxu0 %v165
  %222 = vmatprep.subr.mxu0 0.0
  %223 = vmatpush2.msra.mxu0 0.0
  %224 = vmatprep.subr.mxu0 0.0
  %225 = vmatpush2.msra.mxu0 0.0
  %226 = vmatprep.subr.mxu0 0.0
  %227 = vmatpush2.msra.mxu0 0.0
  %228 = vmatprep.subr.mxu0 0.0
  %229 = vmatpush2.msra.mxu0 0.0
  %230 = vmatprep.subr.mxu0 0.0
  %231 = vmatpush2.msra.mxu0 0.0
  %232 = vmatprep.subr.mxu0 0.0
  %233 = vmatpush2.msra.mxu0 0.0
  %234 = vmatprep.subr.mxu0 0.0
  %235 = vmatpush2.msra.mxu0 0.0
  %236 = vmatprep.subr.mxu0 0.0
  %237 = vmatpush2.msra.mxu0 0.0
  %238 = vmatprep.subr.mxu0 0.0
  %239 = vmatpush2.msra.mxu0 0.0
  %240 = vmatprep.subr.mxu0 0.0
  %241 = vmatpush2.msra.mxu0 0.0
  %242 = vmatprep.subr.mxu0 0.0
  %243 = vmatpush2.msra.mxu0 0.0
  %244 = vmatprep.subr.mxu0 0.0
  %245 = vmatpush2.msra.mxu0 0.0
  %246 = vmatprep.subr.mxu0 0.0
  %247 = vmatpush2.msra.mxu0 0.0
  %248 = vmatprep.subr.mxu0 0.0
  %249 = vmatpush2.msra.mxu0 0.0
  %250 = vmatprep.subr.mxu0 0.0
  %251 = vmatpush2.msra.mxu0 0.0
  %252 = vmatprep.subr.mxu0 0.0
  %253 = vmatpush2.msra.mxu0 0.0
  %254 = vmatprep.mubr.f32.mxu0 0.0
  %255 = vmatmul.mubr.f32.gmra.mxu0 %v182
  %v256 = vpop.f32.mrf.mxu0
  %v257 = vadd.f32 0.0, %v256
  %v258 = vpop.f32.mrf.mxu0
  %v259 = vadd.f32 0.0, %v258
  %260 = vmatprep.mubr.f32.mxu0 0.0
  %261 = vmatmul.mubr.f32.gmra.mxu0 %v184
  %v262 = vpop.f32.mrf.mxu0
  %v263 = vadd.f32 0.0, %v262
  %v264 = vpop.f32.mrf.mxu0
  %v265 = vadd.f32 0.0, %v264
  %266 = vmatprep.mubr.f32.mxu0 0.0
  %267 = vmatmul.mubr.f32.gmra.mxu0 %v186
  %v268 = vpop.f32.mrf.mxu0
  %v269 = vadd.f32 0.0, %v268
  %v270 = vpop.f32.mrf.mxu0
  %v271 = vadd.f32 0.0, %v270
  %272 = vmatprep.mubr.f32.mxu0 0.0
  %273 = vmatmul.mubr.f32.gmra.mxu0 %v188
  %v274 = vpop.f32.mrf.mxu0
  %v275 = vadd.f32 0.0, %v274
  %v276 = vpop.f32.mrf.mxu0
  %v277 = vadd.f32 0.0, %v276
  %278 = vdwg.mxu0
  %v279 = vld [vmem:[%s1] sm:$0xff]
  %v280 = vld [vmem:[%s1 + $0x8] sm:$0xff]
  %v281 = vld [vmem:[%s1 + $0x10] sm:$0xff]
  %v282 = vld [vmem:[%s1 + $0x18] sm:$0xff]
  %v283 = vld [vmem:[%s1 + $0x20] sm:$0xff]
  %v284 = vld [vmem:[%s1 + $0x28] sm:$0xff]
  %v285 = vld [vmem:[%s1 + $0x30] sm:$0xff]
  %v286 = vld [vmem:[%s1 + $0x38] sm:$0xff]
  %v288 = vsel %vm181, %v119, 0
  %v291 = vsel %vm181, %v120, 0
  %v294 = vsel %vm181, %v121, 0
  %v297 = vsel %vm181, %v122, 0
  %299 = vmatprep.subr.mxu0 0.0
  %300 = vmatpush1.msra.mxu0 0.0
  %301 = vmatprep.subr.mxu0 0.0
  %302 = vmatpush1.msra.mxu0 0.0
  %303 = vmatprep.subr.mxu0 0.0
  %304 = vmatpush1.msra.mxu0 0.0
  %305 = vmatprep.subr.mxu0 0.0
  %306 = vmatpush1.msra.mxu0 0.0
  %307 = vmatprep.subr.mxu0 0.0
  %308 = vmatpush1.msra.mxu0 0.0
  %309 = vmatprep.subr.mxu0 0.0
  %310 = vmatpush1.msra.mxu0 0.0
  %311 = vmatprep.subr.mxu0 0.0
  %312 = vmatpush1.msra.mxu0 0.0
  %313 = vmatprep.subr.mxu0 0.0
  %314 = vmatpush1.msra.mxu0 0.0
  %315 = vmatprep.subr.mxu0 0.0
  %316 = vmatpush1.msra.mxu0 %v286
  %317 = vmatprep.subr.mxu0 0.0
  %318 = vmatpush1.msra.mxu0 %v285
  %319 = vmatprep.subr.mxu0 0.0
  %320 = vmatpush1.msra.mxu0 %v284
  %321 = vmatprep.subr.mxu0 0.0
  %322 = vmatpush1.msra.mxu0 %v283
  %323 = vmatprep.subr.mxu0 0.0
  %324 = vmatpush1.msra.mxu0 %v282
  %325 = vmatprep.subr.mxu0 0.0
  %326 = vmatpush1.msra.mxu0 %v281
  %327 = vmatprep.subr.mxu0 0.0
  %328 = vmatpush1.msra.mxu0 %v280
  %329 = vmatprep.subr.mxu0 0.0
  %330 = vmatpush1.msra.mxu0 %v279
  %331 = vmatprep.subr.mxu0 0.0
  %332 = vmatpush2.msra.mxu0 0.0
  %333 = vmatprep.subr.mxu0 0.0
  %334 = vmatpush2.msra.mxu0 0.0
  %335 = vmatprep.subr.mxu0 0.0
  %336 = vmatpush2.msra.mxu0 0.0
  %337 = vmatprep.subr.mxu0 0.0
  %338 = vmatpush2.msra.mxu0 0.0
  %339 = vmatprep.subr.mxu0 0.0
  %340 = vmatpush2.msra.mxu0 0.0
  %341 = vmatprep.subr.mxu0 0.0
  %342 = vmatpush2.msra.mxu0 0.0
  %343 = vmatprep.subr.mxu0 0.0
  %344 = vmatpush2.msra.mxu0 0.0
  %345 = vmatprep.subr.mxu0 0.0
  %346 = vmatpush2.msra.mxu0 0.0
  %347 = vmatprep.subr.mxu0 0.0
  %348 = vmatpush2.msra.mxu0 0.0
  %349 = vmatprep.subr.mxu0 0.0
  %350 = vmatpush2.msra.mxu0 0.0
  %351 = vmatprep.subr.mxu0 0.0
  %352 = vmatpush2.msra.mxu0 0.0
  %353 = vmatprep.subr.mxu0 0.0
  %354 = vmatpush2.msra.mxu0 0.0
  %355 = vmatprep.subr.mxu0 0.0
  %356 = vmatpush2.msra.mxu0 0.0
  %357 = vmatprep.subr.mxu0 0.0
  %358 = vmatpush2.msra.mxu0 0.0
  %359 = vmatprep.subr.mxu0 0.0
  %360 = vmatpush2.msra.mxu0 0.0
  %361 = vmatprep.subr.mxu0 0.0
  %362 = vmatpush2.msra.mxu0 0.0
  %363 = vmatprep.mubr.f32.mxu0 0.0
  %364 = vmatmul.mubr.f32.gmra.mxu0 %v288
  %v365 = vpop.f32.mrf.mxu0
  %v366 = vadd.f32 0.0, %v365
  %v367 = vpop.f32.mrf.mxu0
  %368 = vmatprep.mubr.f32.mxu0 0.0
  %369 = vmatmul.mubr.f32.gmra.mxu0 %v291
  %v370 = vpop.f32.mrf.mxu0
  %v371 = vadd.f32 0.0, %v370
  %v372 = vpop.f32.mrf.mxu0
  %373 = vmatprep.mubr.f32.mxu0 0.0
  %374 = vmatmul.mubr.f32.gmra.mxu0 %v294
  %v375 = vpop.f32.mrf.mxu0
  %v376 = vadd.f32 0.0, %v375
  %v377 = vpop.f32.mrf.mxu0
  %378 = vmatprep.mubr.f32.mxu0 0.0
  %379 = vmatmul.mubr.f32.gmra.mxu0 %v297
  %v380 = vpop.f32.mrf.mxu0
  %v381 = vadd.f32 0.0, %v380
  %v382 = vpop.f32.mrf.mxu0
  %383 = vdwg.mxu0
  %v384 = vadd.f32 %v257, %v366
  %v385 = vadd.f32 %v263, %v371
  %v386 = vadd.f32 %v269, %v376
  %v387 = vadd.f32 %v275, %v381
  %v388 = vld [vmem:[%s3] sm:$0xff]
  %v389 = vld [vmem:[%s3 + $0x8] sm:$0xff]
  %v390 = vld [vmem:[%s3 + $0x10] sm:$0xff]
  %v391 = vld [vmem:[%s3 + $0x18] sm:$0xff]
  %v392 = vld [vmem:[%s3 + $0x20] sm:$0xff]
  %v393 = vld [vmem:[%s3 + $0x28] sm:$0xff]
  %v394 = vld [vmem:[%s3 + $0x30] sm:$0xff]
  %v395 = vld [vmem:[%s3 + $0x38] sm:$0xff]
  %v397 = vsel %vm181, %v144, 0
  %v400 = vsel %vm181, %v145, 0
  %v403 = vsel %vm181, %v146, 0
  %v406 = vsel %vm181, %v147, 0
  %408 = vmatprep.subr.mxu0 0.0
  %409 = vmatpush1.msra.mxu0 0.0
  %410 = vmatprep.subr.mxu0 0.0
  %411 = vmatpush1.msra.mxu0 0.0
  %412 = vmatprep.subr.mxu0 0.0
  %413 = vmatpush1.msra.mxu0 0.0
  %414 = vmatprep.subr.mxu0 0.0
  %415 = vmatpush1.msra.mxu0 0.0
  %416 = vmatprep.subr.mxu0 0.0
  %417 = vmatpush1.msra.mxu0 0.0
  %418 = vmatprep.subr.mxu0 0.0
  %419 = vmatpush1.msra.mxu0 0.0
  %420 = vmatprep.subr.mxu0 0.0
  %421 = vmatpush1.msra.mxu0 0.0
  %422 = vmatprep.subr.mxu0 0.0
  %423 = vmatpush1.msra.mxu0 0.0
  %424 = vmatprep.subr.mxu0 0.0
  %425 = vmatpush1.msra.mxu0 %v395
  %426 = vmatprep.subr.mxu0 0.0
  %427 = vmatpush1.msra.mxu0 %v394
  %428 = vmatprep.subr.mxu0 0.0
  %429 = vmatpush1.msra.mxu0 %v393
  %430 = vmatprep.subr.mxu0 0.0
  %431 = vmatpush1.msra.mxu0 %v392
  %432 = vmatprep.subr.mxu0 0.0
  %433 = vmatpush1.msra.mxu0 %v391
  %434 = vmatprep.subr.mxu0 0.0
  %435 = vmatpush1.msra.mxu0 %v390
  %436 = vmatprep.subr.mxu0 0.0
  %437 = vmatpush1.msra.mxu0 %v389
  %438 = vmatprep.subr.mxu0 0.0
  %439 = vmatpush1.msra.mxu0 %v388
  %440 = vmatprep.subr.mxu0 0.0
  %441 = vmatpush2.msra.mxu0 0.0
  %442 = vmatprep.subr.mxu0 0.0
  %443 = vmatpush2.msra.mxu0 0.0
  %444 = vmatprep.subr.mxu0 0.0
  %445 = vmatpush2.msra.mxu0 0.0
  %446 = vmatprep.subr.mxu0 0.0
  %447 = vmatpush2.msra.mxu0 0.0
  %448 = vmatprep.subr.mxu0 0.0
  %449 = vmatpush2.msra.mxu0 0.0
  %450 = vmatprep.subr.mxu0 0.0
  %451 = vmatpush2.msra.mxu0 0.0
  %452 = vmatprep.subr.mxu0 0.0
  %453 = vmatpush2.msra.mxu0 0.0
  %454 = vmatprep.subr.mxu0 0.0
  %455 = vmatpush2.msra.mxu0 0.0
  %456 = vmatprep.subr.mxu0 0.0
  %457 = vmatpush2.msra.mxu0 0.0
  %458 = vmatprep.subr.mxu0 0.0
  %459 = vmatpush2.msra.mxu0 0.0
  %460 = vmatprep.subr.mxu0 0.0
  %461 = vmatpush2.msra.mxu0 0.0
  %462 = vmatprep.subr.mxu0 0.0
  %463 = vmatpush2.msra.mxu0 0.0
  %464 = vmatprep.subr.mxu0 0.0
  %465 = vmatpush2.msra.mxu0 0.0
  %466 = vmatprep.subr.mxu0 0.0
  %467 = vmatpush2.msra.mxu0 0.0
  %468 = vmatprep.subr.mxu0 0.0
  %469 = vmatpush2.msra.mxu0 0.0
  %470 = vmatprep.subr.mxu0 0.0
  %471 = vmatpush2.msra.mxu0 0.0
  %472 = vmatprep.mubr.f32.mxu0 0.0
  %473 = vmatmul.mubr.f32.gmra.mxu0 %v397
  %v474 = vpop.f32.mrf.mxu0
  %v475 = vadd.f32 0.0, %v474
  %v476 = vpop.f32.mrf.mxu0
  %477 = vmatprep.mubr.f32.mxu0 0.0
  %478 = vmatmul.mubr.f32.gmra.mxu0 %v400
  %v479 = vpop.f32.mrf.mxu0
  %v480 = vadd.f32 0.0, %v479
  %v481 = vpop.f32.mrf.mxu0
  %482 = vmatprep.mubr.f32.mxu0 0.0
  %483 = vmatmul.mubr.f32.gmra.mxu0 %v403
  %v484 = vpop.f32.mrf.mxu0
  %v485 = vadd.f32 0.0, %v484
  %v486 = vpop.f32.mrf.mxu0
  %487 = vmatprep.mubr.f32.mxu0 0.0
  %488 = vmatmul.mubr.f32.gmra.mxu0 %v406
  %v489 = vpop.f32.mrf.mxu0
  %v490 = vadd.f32 0.0, %v489
  %v491 = vpop.f32.mrf.mxu0
  %492 = vdwg.mxu0
  %v493 = vadd.f32 %v384, %v475
  %v494 = vadd.f32 %v385, %v480
  %v495 = vadd.f32 %v386, %v485
  %v496 = vadd.f32 %v387, %v490
  %v497 = vld [vmem:[%s5] sm:$0x1]
  %v498 = vld [vmem:[%s5 + $0x1] sm:$0x1]
  %v499 = vld [vmem:[%s5 + $0x2] sm:$0x1]
  %v500 = vld [vmem:[%s5 + $0x3] sm:$0x1]
  %v501 = vld [vmem:[%s5 + $0x4] sm:$0x1]
  %v502 = vld [vmem:[%s5 + $0x5] sm:$0x1]
  %v503 = vadd.f32 %v493, %v494
  %v504 = vadd.f32 %v503, %v495
  %v505 = vadd.f32 %v504, %v496
  %v506 = vrot.slane %v505, 4
  %v507 = vadd.f32 %v505, %v506
  %v508 = vrot.slane %v507, 2
  %v509 = vadd.f32 %v507, %v508
  %v510 = vrot.slane %v509, 1
  %v511 = vadd.f32 %v509, %v510
  %v512 = vadd.f32 %v259, %v265
  %v513 = vadd.f32 %v512, %v271
  %v514 = vadd.f32 %v513, %v277
  %v515 = vrot.slane %v514, 4
  %v516 = vadd.f32 %v514, %v515
  %v517 = vrot.slane %v516, 2
  %v518 = vadd.f32 %v516, %v517
  %v519 = vrot.slane %v518, 1
  %v520 = vadd.f32 %v518, %v519
  %v521 = vmul.f32 %v493, %v493
  %v522 = vmul.f32 %v494, %v494
  %v523 = vmul.f32 %v495, %v495
  %v524 = vmul.f32 %v496, %v496
  %v525 = vadd.f32 %v521, %v522
  %v526 = vadd.f32 %v525, %v523
  %v527 = vadd.f32 %v526, %v524
  %v528 = vrot.slane %v527, 4
  %v529 = vadd.f32 %v527, %v528
  %v530 = vrot.slane %v529, 2
  %v531 = vadd.f32 %v529, %v530
  %v532 = vrot.slane %v531, 1
  %v533 = vadd.f32 %v531, %v532
  %v534 = vmul.f32 %v259, %v259
  %v535 = vmul.f32 %v265, %v265
  %v536 = vmul.f32 %v271, %v271
  %v537 = vmul.f32 %v277, %v277
  %v538 = vadd.f32 %v534, %v535
  %v539 = vadd.f32 %v538, %v536
  %v540 = vadd.f32 %v539, %v537
  %v541 = vrot.slane %v540, 4
  %v542 = vadd.f32 %v540, %v541
  %v543 = vrot.slane %v542, 2
  %v544 = vadd.f32 %v542, %v543
  %v545 = vrot.slane %v544, 1
  %v546 = vadd.f32 %v544, %v545
  %v547 = vsel %vm98, %v511, %v520
  %vm548 = vcmask 1041408
  %v549 = vsel %vm548, %v547, %v533
  %vm550 = vcmask 1042432
  %v551 = vsel %vm550, %v549, %v546
  %552 = vmatprep.subr.mxu0 0.0
  %553 = vmatpush1.msra.mxu0 %v163
  %554 = vmatprep.subr.mxu0 0.0
  %555 = vmatpush1.msra.mxu0 %v162
  %556 = vmatprep.subr.mxu0 0.0
  %557 = vmatpush1.msra.mxu0 %v161
  %558 = vmatprep.subr.mxu0 0.0
  %559 = vmatpush1.msra.mxu0 %v160
  %560 = vmatprep.subr.mxu0 0.0
  %561 = vmatpush1.msra.mxu0 %v159
  %562 = vmatprep.subr.mxu0 0.0
  %563 = vmatpush1.msra.mxu0 %v158
  %564 = vmatprep.subr.mxu0 0.0
  %565 = vmatpush1.msra.mxu0 %v157
  %566 = vmatprep.subr.mxu0 0.0
  %567 = vmatpush1.msra.mxu0 %v156
  %568 = vmatprep.subr.mxu0 0.0
  %569 = vmatpush1.msra.mxu0 %v155
  %570 = vmatprep.subr.mxu0 0.0
  %571 = vmatpush1.msra.mxu0 %v154
  %572 = vmatprep.subr.mxu0 0.0
  %573 = vmatpush1.msra.mxu0 %v153
  %574 = vmatprep.subr.mxu0 0.0
  %575 = vmatpush1.msra.mxu0 %v152
  %576 = vmatprep.subr.mxu0 0.0
  %577 = vmatpush1.msra.mxu0 %v151
  %578 = vmatprep.subr.mxu0 0.0
  %579 = vmatpush1.msra.mxu0 %v150
  %580 = vmatprep.subr.mxu0 0.0
  %581 = vmatpush1.msra.mxu0 %v149
  %582 = vmatprep.subr.mxu0 0.0
  %583 = vmatpush1.msra.mxu0 %v148
  %584 = vmatprep.subr.mxu0 0.0
  %585 = vmatpush2.msra.mxu0 0.0
  %586 = vmatprep.subr.mxu0 0.0
  %587 = vmatpush2.msra.mxu0 0.0
  %588 = vmatprep.subr.mxu0 0.0
  %589 = vmatpush2.msra.mxu0 0.0
  %590 = vmatprep.subr.mxu0 0.0
  %591 = vmatpush2.msra.mxu0 0.0
  %592 = vmatprep.subr.mxu0 0.0
  %593 = vmatpush2.msra.mxu0 0.0
  %594 = vmatprep.subr.mxu0 0.0
  %595 = vmatpush2.msra.mxu0 0.0
  %596 = vmatprep.subr.mxu0 0.0
  %597 = vmatpush2.msra.mxu0 0.0
  %598 = vmatprep.subr.mxu0 0.0
  %599 = vmatpush2.msra.mxu0 0.0
  %600 = vmatprep.subr.mxu0 0.0
  %601 = vmatpush2.msra.mxu0 0.0
  %602 = vmatprep.subr.mxu0 0.0
  %603 = vmatpush2.msra.mxu0 0.0
  %604 = vmatprep.subr.mxu0 0.0
  %605 = vmatpush2.msra.mxu0 0.0
  %606 = vmatprep.subr.mxu0 0.0
  %607 = vmatpush2.msra.mxu0 0.0
  %608 = vmatprep.subr.mxu0 0.0
  %609 = vmatpush2.msra.mxu0 0.0
  %610 = vmatprep.subr.mxu0 0.0
  %611 = vmatpush2.msra.mxu0 0.0
  %612 = vmatprep.subr.mxu0 0.0
  %613 = vmatpush2.msra.mxu0 0.0
  %614 = vmatprep.subr.mxu0 0.0
  %615 = vmatpush2.msra.mxu0 0.0
  %616 = vmatprep.mubr.f32.mxu0 0.0
  %617 = vmatmul.mubr.f32.gmra.mxu0 %v551
  %v618 = vpop.f32.mrf.mxu0
  %v619 = vadd.f32 0.0, %v618
  %v620 = vpop.f32.mrf.mxu0
  %621 = vdwg.mxu0
  %v622 = vmul.f32 %v619, 0.001953125
  %v623 = vmul.f32 %v622, %v622
  %v625 = vrot.slane %v623, 6
  %v627 = vsub.f32 %v622, %v625
  %v629 = vrot.slane %v501, 7
  %v631 = vsel %vm98, %v497, %v629
  %v632 = vadd.f32 %v627, 1e-05
  %v633 = vrsqrt.pop %v632
  %v635 = vrot.slane %v633, 2
  %v637 = vmul.f32 %v631, %v635
  %v639 = vrot.slane %v502, 7
  %v641 = vsel %vm98, %v498, %v639
  %v642 = vmul.f32 %v622, %v637
  %v643 = vsub.f32 %v641, %v642
  %v645 = vrot.slane %v643, 6
  %v647 = vsel %vm548, %v637, %v645
  %vm648 = vcmask 64512
  %v650 = vsel %vm648, %v647, 0
  %652 = vmatprep.subr.mxu0 0.0
  %653 = vmatpush1.msra.mxu0 0.0
  %654 = vmatprep.subr.mxu0 0.0
  %655 = vmatpush1.msra.mxu0 0.0
  %656 = vmatprep.subr.mxu0 0.0
  %657 = vmatpush1.msra.mxu0 0.0
  %658 = vmatprep.subr.mxu0 0.0
  %659 = vmatpush1.msra.mxu0 0.0
  %660 = vmatprep.subr.mxu0 0.0
  %661 = vmatpush1.msra.mxu0 0.0
  %662 = vmatprep.subr.mxu0 0.0
  %663 = vmatpush1.msra.mxu0 0.0
  %664 = vmatprep.subr.mxu0 0.0
  %665 = vmatpush1.msra.mxu0 0.0
  %666 = vmatprep.subr.mxu0 0.0
  %667 = vmatpush1.msra.mxu0 0.0
  %668 = vmatprep.subr.mxu0 0.0
  %669 = vmatpush1.msra.mxu0 0.0
  %670 = vmatprep.subr.mxu0 0.0
  %671 = vmatpush1.msra.mxu0 0.0
  %672 = vmatprep.subr.mxu0 0.0
  %673 = vmatpush1.msra.mxu0 0.0
  %674 = vmatprep.subr.mxu0 0.0
  %675 = vmatpush1.msra.mxu0 0.0
  %676 = vmatprep.subr.mxu0 0.0
  %677 = vmatpush1.msra.mxu0 0.0
  %678 = vmatprep.subr.mxu0 0.0
  %679 = vmatpush1.msra.mxu0 0.0
  %680 = vmatprep.subr.mxu0 0.0
  %681 = vmatpush1.msra.mxu0 0.0
  %682 = vmatprep.subr.mxu0 0.0
  %683 = vmatpush1.msra.mxu0 %v164
  %684 = vmatprep.subr.mxu0 0.0
  %685 = vmatpush2.msra.mxu0 0.0
  %686 = vmatprep.subr.mxu0 0.0
  %687 = vmatpush2.msra.mxu0 0.0
  %688 = vmatprep.subr.mxu0 0.0
  %689 = vmatpush2.msra.mxu0 0.0
  %690 = vmatprep.subr.mxu0 0.0
  %691 = vmatpush2.msra.mxu0 0.0
  %692 = vmatprep.subr.mxu0 0.0
  %693 = vmatpush2.msra.mxu0 0.0
  %694 = vmatprep.subr.mxu0 0.0
  %695 = vmatpush2.msra.mxu0 0.0
  %696 = vmatprep.subr.mxu0 0.0
  %697 = vmatpush2.msra.mxu0 0.0
  %698 = vmatprep.subr.mxu0 0.0
  %699 = vmatpush2.msra.mxu0 0.0
  %700 = vmatprep.subr.mxu0 0.0
  %701 = vmatpush2.msra.mxu0 0.0
  %702 = vmatprep.subr.mxu0 0.0
  %703 = vmatpush2.msra.mxu0 0.0
  %704 = vmatprep.subr.mxu0 0.0
  %705 = vmatpush2.msra.mxu0 0.0
  %706 = vmatprep.subr.mxu0 0.0
  %707 = vmatpush2.msra.mxu0 0.0
  %708 = vmatprep.subr.mxu0 0.0
  %709 = vmatpush2.msra.mxu0 0.0
  %710 = vmatprep.subr.mxu0 0.0
  %711 = vmatpush2.msra.mxu0 0.0
  %712 = vmatprep.subr.mxu0 0.0
  %713 = vmatpush2.msra.mxu0 0.0
  %714 = vmatprep.subr.mxu0 0.0
  %715 = vmatpush2.msra.mxu0 0.0
  %716 = vmatprep.mubr.f32.mxu0 0.0
  %717 = vmatmul.mubr.f32.gmra.mxu0 %v650
  %v718 = vpop.f32.mrf.mxu0
  %v719 = vadd.f32 0.0, %v718
  %v720 = vpop.f32.mrf.mxu0
  %721 = vdwg.mxu0
  %v722 = vlaneseq
  %v723 = vshrl.u32 %v722, 7
  %v724 = vsub.s32 0, %v723
  %v725 = vrot.slane %v719, %v724
  %v726 = vmul.f32 %v493, %v725
  %v727 = vmul.f32 %v494, %v725
  %v728 = vmul.f32 %v495, %v725
  %v729 = vmul.f32 %v496, %v725
  %v730 = vlaneseq
  %v731 = vshrl.u32 %v730, 7
  %v732 = vsub.s32 2, %v731
  %v733 = vrot.slane %v719, %v732
  %v734 = vadd.f32 %v726, %v733
  %v735 = vadd.f32 %v727, %v733
  %v736 = vadd.f32 %v728, %v733
  %v737 = vadd.f32 %v729, %v733
  %v738 = vmax.f32 %v734, 0.0
  %v739 = vmax.f32 %v735, 0.0
  %v740 = vmax.f32 %v736, 0.0
  %v741 = vmax.f32 %v737, 0.0
  %v746 = vrot.slane %v738, 7
  %v747 = vrot.slane %v739, 7
  %v748 = vsel %vm98, %v746, %v747
  %v749 = vrot.slane %v740, 7
  %v750 = vsel %vm98, %v747, %v749
  %v751 = vrot.slane %v741, 7
  %v752 = vsel %vm98, %v749, %v751
  %v757 = vsel %vm98, 0.0, %v746
  %v758 = vsel %vm115, %v757, 0.0
  %v759 = vsel %vm116, %v748, 0.0
  %v760 = vsel %vm117, %v750, 0.0
  %v761 = vsel %vm118, %v752, 0.0
  %v762 = vrot.slane %v738, 1
  %v763 = vrot.slane %v739, 1
  %v764 = vsel %vm123, %v762, %v763
  %v765 = vrot.slane %v740, 1
  %v766 = vsel %vm123, %v763, %v765
  %v767 = vrot.slane %v741, 1
  %v768 = vsel %vm123, %v765, %v767
  %v773 = vsel %vm123, %v767, 0.0
  %v774 = vsel %vm140, %v764, 0.0
  %v775 = vsel %vm141, %v766, 0.0
  %v776 = vsel %vm142, %v768, 0.0
  %v777 = vsel %vm143, %v773, 0.0
  %v778 = vld [vmem:[%s4] sm:$0xff]
  %v779 = vld [vmem:[%s4 + $0x8] sm:$0xff]
  %v780 = vld [vmem:[%s4 + $0x10] sm:$0xff]
  %v781 = vld [vmem:[%s4 + $0x18] sm:$0xff]
  %v782 = vld [vmem:[%s4 + $0x20] sm:$0xff]
  %v783 = vld [vmem:[%s4 + $0x28] sm:$0xff]
  %v784 = vld [vmem:[%s4 + $0x30] sm:$0xff]
  %v785 = vld [vmem:[%s4 + $0x38] sm:$0xff]
  %v786 = vld [vmem:[%s4 + $0x40] sm:$0xff]
  %v787 = vld [vmem:[%s4 + $0x48] sm:$0xff]
  %v788 = vld [vmem:[%s4 + $0x50] sm:$0xff]
  %v789 = vld [vmem:[%s4 + $0x58] sm:$0xff]
  %v790 = vld [vmem:[%s4 + $0x60] sm:$0xff]
  %v791 = vld [vmem:[%s4 + $0x68] sm:$0xff]
  %v792 = vld [vmem:[%s4 + $0x70] sm:$0xff]
  %v793 = vld [vmem:[%s4 + $0x78] sm:$0xff]
  %v794 = vld [vmem:[%s4 + $0x80] sm:$0xff]
  %v795 = vld [vmem:[%s4 + $0x88] sm:$0xff]
  %v796 = vld [vmem:[%s4 + $0x90] sm:$0xff]
  %v797 = vld [vmem:[%s4 + $0x98] sm:$0xff]
  %v798 = vld [vmem:[%s4 + $0xa0] sm:$0xff]
  %v799 = vld [vmem:[%s4 + $0xa8] sm:$0xff]
  %v800 = vld [vmem:[%s4 + $0xb0] sm:$0xff]
  %v801 = vld [vmem:[%s4 + $0xb8] sm:$0xff]
  %v802 = vld [vmem:[%s4 + $0xc0] sm:$0xff]
  %v803 = vld [vmem:[%s4 + $0xc8] sm:$0xff]
  %v804 = vld [vmem:[%s4 + $0xd0] sm:$0xff]
  %v805 = vld [vmem:[%s4 + $0xd8] sm:$0xff]
  %v806 = vld [vmem:[%s4 + $0xe0] sm:$0xff]
  %v807 = vld [vmem:[%s4 + $0xe8] sm:$0xff]
  %v808 = vld [vmem:[%s4 + $0xf0] sm:$0xff]
  %v809 = vld [vmem:[%s4 + $0xf8] sm:$0xff]
  %v810 = vld [vmem:[%s4 + $0x100] sm:$0xff]
  %v811 = vld [vmem:[%s4 + $0x108] sm:$0xff]
  %v812 = vld [vmem:[%s4 + $0x110] sm:$0xff]
  %v813 = vld [vmem:[%s4 + $0x118] sm:$0xff]
  %v814 = vld [vmem:[%s4 + $0x120] sm:$0xff]
  %v815 = vld [vmem:[%s4 + $0x128] sm:$0xff]
  %v816 = vld [vmem:[%s4 + $0x130] sm:$0xff]
  %v817 = vld [vmem:[%s4 + $0x138] sm:$0xff]
  %v818 = vld [vmem:[%s4 + $0x140] sm:$0xff]
  %v819 = vld [vmem:[%s4 + $0x148] sm:$0xff]
  %v820 = vld [vmem:[%s4 + $0x150] sm:$0xff]
  %v821 = vld [vmem:[%s4 + $0x158] sm:$0xff]
  %v822 = vld [vmem:[%s4 + $0x160] sm:$0xff]
  %v823 = vld [vmem:[%s4 + $0x168] sm:$0xff]
  %v824 = vld [vmem:[%s4 + $0x170] sm:$0xff]
  %v825 = vld [vmem:[%s4 + $0x178] sm:$0xff]
  %826 = vmatprep.subr.mxu0 0.0
  %827 = vmatpush1.msra.mxu0 %v793
  %828 = vmatprep.subr.mxu0 0.0
  %829 = vmatpush1.msra.mxu0 %v792
  %830 = vmatprep.subr.mxu0 0.0
  %831 = vmatpush1.msra.mxu0 %v791
  %832 = vmatprep.subr.mxu0 0.0
  %833 = vmatpush1.msra.mxu0 %v790
  %834 = vmatprep.subr.mxu0 0.0
  %835 = vmatpush1.msra.mxu0 %v789
  %836 = vmatprep.subr.mxu0 0.0
  %837 = vmatpush1.msra.mxu0 %v788
  %838 = vmatprep.subr.mxu0 0.0
  %839 = vmatpush1.msra.mxu0 %v787
  %840 = vmatprep.subr.mxu0 0.0
  %841 = vmatpush1.msra.mxu0 %v786
  %842 = vmatprep.subr.mxu0 0.0
  %843 = vmatpush1.msra.mxu0 %v785
  %844 = vmatprep.subr.mxu0 0.0
  %845 = vmatpush1.msra.mxu0 %v784
  %846 = vmatprep.subr.mxu0 0.0
  %847 = vmatpush1.msra.mxu0 %v783
  %848 = vmatprep.subr.mxu0 0.0
  %849 = vmatpush1.msra.mxu0 %v782
  %850 = vmatprep.subr.mxu0 0.0
  %851 = vmatpush1.msra.mxu0 %v781
  %852 = vmatprep.subr.mxu0 0.0
  %853 = vmatpush1.msra.mxu0 %v780
  %854 = vmatprep.subr.mxu0 0.0
  %855 = vmatpush1.msra.mxu0 %v779
  %856 = vmatprep.subr.mxu0 0.0
  %857 = vmatpush1.msra.mxu0 %v778
  %858 = vmatprep.subr.mxu0 0.0
  %859 = vmatpush2.msra.mxu0 %v809
  %860 = vmatprep.subr.mxu0 0.0
  %861 = vmatpush2.msra.mxu0 %v808
  %862 = vmatprep.subr.mxu0 0.0
  %863 = vmatpush2.msra.mxu0 %v807
  %864 = vmatprep.subr.mxu0 0.0
  %865 = vmatpush2.msra.mxu0 %v806
  %866 = vmatprep.subr.mxu0 0.0
  %867 = vmatpush2.msra.mxu0 %v805
  %868 = vmatprep.subr.mxu0 0.0
  %869 = vmatpush2.msra.mxu0 %v804
  %870 = vmatprep.subr.mxu0 0.0
  %871 = vmatpush2.msra.mxu0 %v803
  %872 = vmatprep.subr.mxu0 0.0
  %873 = vmatpush2.msra.mxu0 %v802
  %874 = vmatprep.subr.mxu0 0.0
  %875 = vmatpush2.msra.mxu0 %v801
  %876 = vmatprep.subr.mxu0 0.0
  %877 = vmatpush2.msra.mxu0 %v800
  %878 = vmatprep.subr.mxu0 0.0
  %879 = vmatpush2.msra.mxu0 %v799
  %880 = vmatprep.subr.mxu0 0.0
  %881 = vmatpush2.msra.mxu0 %v798
  %882 = vmatprep.subr.mxu0 0.0
  %883 = vmatpush2.msra.mxu0 %v797
  %884 = vmatprep.subr.mxu0 0.0
  %885 = vmatpush2.msra.mxu0 %v796
  %886 = vmatprep.subr.mxu0 0.0
  %887 = vmatpush2.msra.mxu0 %v795
  %888 = vmatprep.subr.mxu0 0.0
  %889 = vmatpush2.msra.mxu0 %v794
  %890 = vmatprep.mubr.f32.mxu0 %v738
  %891 = vmatmul.mubr.f32.gmra.mxu0 %v758
  %v892 = vpop.f32.mrf.mxu0
  %v893 = vadd.f32 0.0, %v892
  %v894 = vpop.f32.mrf.mxu0
  %895 = vmatprep.mubr.f32.mxu0 %v739
  %896 = vmatmul.mubr.f32.gmra.mxu0 %v759
  %v897 = vpop.f32.mrf.mxu0
  %v898 = vadd.f32 0.0, %v897
  %v899 = vpop.f32.mrf.mxu0
  %900 = vmatprep.mubr.f32.mxu0 %v740
  %901 = vmatmul.mubr.f32.gmra.mxu0 %v760
  %v902 = vpop.f32.mrf.mxu0
  %v903 = vadd.f32 0.0, %v902
  %v904 = vpop.f32.mrf.mxu0
  %905 = vmatprep.mubr.f32.mxu0 %v741
  %906 = vmatmul.mubr.f32.gmra.mxu0 %v761
  %v907 = vpop.f32.mrf.mxu0
  %v908 = vadd.f32 0.0, %v907
  %v909 = vpop.f32.mrf.mxu0
  %910 = vdwg.mxu0
  %911 = vmatprep.subr.mxu0 0.0
  %912 = vmatpush1.msra.mxu0 %v825
  %913 = vmatprep.subr.mxu0 0.0
  %914 = vmatpush1.msra.mxu0 %v824
  %915 = vmatprep.subr.mxu0 0.0
  %916 = vmatpush1.msra.mxu0 %v823
  %917 = vmatprep.subr.mxu0 0.0
  %918 = vmatpush1.msra.mxu0 %v822
  %919 = vmatprep.subr.mxu0 0.0
  %920 = vmatpush1.msra.mxu0 %v821
  %921 = vmatprep.subr.mxu0 0.0
  %922 = vmatpush1.msra.mxu0 %v820
  %923 = vmatprep.subr.mxu0 0.0
  %924 = vmatpush1.msra.mxu0 %v819
  %925 = vmatprep.subr.mxu0 0.0
  %926 = vmatpush1.msra.mxu0 %v818
  %927 = vmatprep.subr.mxu0 0.0
  %928 = vmatpush1.msra.mxu0 %v817
  %929 = vmatprep.subr.mxu0 0.0
  %930 = vmatpush1.msra.mxu0 %v816
  %931 = vmatprep.subr.mxu0 0.0
  %932 = vmatpush1.msra.mxu0 %v815
  %933 = vmatprep.subr.mxu0 0.0
  %934 = vmatpush1.msra.mxu0 %v814
  %935 = vmatprep.subr.mxu0 0.0
  %936 = vmatpush1.msra.mxu0 %v813
  %937 = vmatprep.subr.mxu0 0.0
  %938 = vmatpush1.msra.mxu0 %v812
  %939 = vmatprep.subr.mxu0 0.0
  %940 = vmatpush1.msra.mxu0 %v811
  %941 = vmatprep.subr.mxu0 0.0
  %942 = vmatpush1.msra.mxu0 %v810
  %943 = vmatprep.subr.mxu0 0.0
  %944 = vmatpush2.msra.mxu0 0.0
  %945 = vmatprep.subr.mxu0 0.0
  %946 = vmatpush2.msra.mxu0 0.0
  %947 = vmatprep.subr.mxu0 0.0
  %948 = vmatpush2.msra.mxu0 0.0
  %949 = vmatprep.subr.mxu0 0.0
  %950 = vmatpush2.msra.mxu0 0.0
  %951 = vmatprep.subr.mxu0 0.0
  %952 = vmatpush2.msra.mxu0 0.0
  %953 = vmatprep.subr.mxu0 0.0
  %954 = vmatpush2.msra.mxu0 0.0
  %955 = vmatprep.subr.mxu0 0.0
  %956 = vmatpush2.msra.mxu0 0.0
  %957 = vmatprep.subr.mxu0 0.0
  %958 = vmatpush2.msra.mxu0 0.0
  %959 = vmatprep.subr.mxu0 0.0
  %960 = vmatpush2.msra.mxu0 0.0
  %961 = vmatprep.subr.mxu0 0.0
  %962 = vmatpush2.msra.mxu0 0.0
  %963 = vmatprep.subr.mxu0 0.0
  %964 = vmatpush2.msra.mxu0 0.0
  %965 = vmatprep.subr.mxu0 0.0
  %966 = vmatpush2.msra.mxu0 0.0
  %967 = vmatprep.subr.mxu0 0.0
  %968 = vmatpush2.msra.mxu0 0.0
  %969 = vmatprep.subr.mxu0 0.0
  %970 = vmatpush2.msra.mxu0 0.0
  %971 = vmatprep.subr.mxu0 0.0
  %972 = vmatpush2.msra.mxu0 0.0
  %973 = vmatprep.subr.mxu0 0.0
  %974 = vmatpush2.msra.mxu0 0.0
  %975 = vmatprep.mubr.f32.mxu0 0.0
  %976 = vmatmul.mubr.f32.gmra.mxu0 %v774
  %v977 = vpop.f32.mrf.mxu0
  %v978 = vadd.f32 %v893, %v977
  %v979 = vpop.f32.mrf.mxu0
  %980 = vmatprep.mubr.f32.mxu0 0.0
  %981 = vmatmul.mubr.f32.gmra.mxu0 %v775
  %v982 = vpop.f32.mrf.mxu0
  %v983 = vadd.f32 %v898, %v982
  %v984 = vpop.f32.mrf.mxu0
  %985 = vmatprep.mubr.f32.mxu0 0.0
  %986 = vmatmul.mubr.f32.gmra.mxu0 %v776
  %v987 = vpop.f32.mrf.mxu0
  %v988 = vadd.f32 %v903, %v987
  %v989 = vpop.f32.mrf.mxu0
  %990 = vmatprep.mubr.f32.mxu0 0.0
  %991 = vmatmul.mubr.f32.gmra.mxu0 %v777
  %v992 = vpop.f32.mrf.mxu0
  %v993 = vadd.f32 %v908, %v992
  %v994 = vpop.f32.mrf.mxu0
  %995 = vdwg.mxu0
  %v996 = vadd.f32 %v978, %v983
  %v997 = vadd.f32 %v996, %v988
  %v998 = vadd.f32 %v997, %v993
  %v999 = vrot.slane %v998, 4
  %v1000 = vadd.f32 %v998, %v999
  %v1001 = vrot.slane %v1000, 2
  %v1002 = vadd.f32 %v1000, %v1001
  %v1003 = vrot.slane %v1002, 1
  %v1004 = vadd.f32 %v1002, %v1003
  %v1005 = vmul.f32 %v978, %v978
  %v1006 = vmul.f32 %v983, %v983
  %v1007 = vmul.f32 %v988, %v988
  %v1008 = vmul.f32 %v993, %v993
  %v1009 = vadd.f32 %v1005, %v1006
  %v1010 = vadd.f32 %v1009, %v1007
  %v1011 = vadd.f32 %v1010, %v1008
  %v1012 = vrot.slane %v1011, 4
  %v1013 = vadd.f32 %v1011, %v1012
  %v1014 = vrot.slane %v1013, 2
  %v1015 = vadd.f32 %v1013, %v1014
  %v1016 = vrot.slane %v1015, 1
  %v1017 = vadd.f32 %v1015, %v1016
  %v1018 = vsel %vm98, %v1004, %v1017
  %1019 = vmatprep.subr.mxu0 0.0
  %1020 = vmatpush1.msra.mxu0 %v163
  %1021 = vmatprep.subr.mxu0 0.0
  %1022 = vmatpush1.msra.mxu0 %v162
  %1023 = vmatprep.subr.mxu0 0.0
  %1024 = vmatpush1.msra.mxu0 %v161
  %1025 = vmatprep.subr.mxu0 0.0
  %1026 = vmatpush1.msra.mxu0 %v160
  %1027 = vmatprep.subr.mxu0 0.0
  %1028 = vmatpush1.msra.mxu0 %v159
  %1029 = vmatprep.subr.mxu0 0.0
  %1030 = vmatpush1.msra.mxu0 %v158
  %1031 = vmatprep.subr.mxu0 0.0
  %1032 = vmatpush1.msra.mxu0 %v157
  %1033 = vmatprep.subr.mxu0 0.0
  %1034 = vmatpush1.msra.mxu0 %v156
  %1035 = vmatprep.subr.mxu0 0.0
  %1036 = vmatpush1.msra.mxu0 %v155
  %1037 = vmatprep.subr.mxu0 0.0
  %1038 = vmatpush1.msra.mxu0 %v154
  %1039 = vmatprep.subr.mxu0 0.0
  %1040 = vmatpush1.msra.mxu0 %v153
  %1041 = vmatprep.subr.mxu0 0.0
  %1042 = vmatpush1.msra.mxu0 %v152
  %1043 = vmatprep.subr.mxu0 0.0
  %1044 = vmatpush1.msra.mxu0 %v151
  %1045 = vmatprep.subr.mxu0 0.0
  %1046 = vmatpush1.msra.mxu0 %v150
  %1047 = vmatprep.subr.mxu0 0.0
  %1048 = vmatpush1.msra.mxu0 %v149
  %1049 = vmatprep.subr.mxu0 0.0
  %1050 = vmatpush1.msra.mxu0 %v148
  %1051 = vmatprep.subr.mxu0 0.0
  %1052 = vmatpush2.msra.mxu0 0.0
  %1053 = vmatprep.subr.mxu0 0.0
  %1054 = vmatpush2.msra.mxu0 0.0
  %1055 = vmatprep.subr.mxu0 0.0
  %1056 = vmatpush2.msra.mxu0 0.0
  %1057 = vmatprep.subr.mxu0 0.0
  %1058 = vmatpush2.msra.mxu0 0.0
  %1059 = vmatprep.subr.mxu0 0.0
  %1060 = vmatpush2.msra.mxu0 0.0
  %1061 = vmatprep.subr.mxu0 0.0
  %1062 = vmatpush2.msra.mxu0 0.0
  %1063 = vmatprep.subr.mxu0 0.0
  %1064 = vmatpush2.msra.mxu0 0.0
  %1065 = vmatprep.subr.mxu0 0.0
  %1066 = vmatpush2.msra.mxu0 0.0
  %1067 = vmatprep.subr.mxu0 0.0
  %1068 = vmatpush2.msra.mxu0 0.0
  %1069 = vmatprep.subr.mxu0 0.0
  %1070 = vmatpush2.msra.mxu0 0.0
  %1071 = vmatprep.subr.mxu0 0.0
  %1072 = vmatpush2.msra.mxu0 0.0
  %1073 = vmatprep.subr.mxu0 0.0
  %1074 = vmatpush2.msra.mxu0 0.0
  %1075 = vmatprep.subr.mxu0 0.0
  %1076 = vmatpush2.msra.mxu0 0.0
  %1077 = vmatprep.subr.mxu0 0.0
  %1078 = vmatpush2.msra.mxu0 0.0
  %1079 = vmatprep.subr.mxu0 0.0
  %1080 = vmatpush2.msra.mxu0 0.0
  %1081 = vmatprep.subr.mxu0 0.0
  %1082 = vmatpush2.msra.mxu0 0.0
  %1083 = vmatprep.mubr.f32.mxu0 0.0
  %1084 = vmatmul.mubr.f32.gmra.mxu0 %v1018
  %v1085 = vpop.f32.mrf.mxu0
  %v1086 = vadd.f32 0.0, %v1085
  %v1087 = vpop.f32.mrf.mxu0
  %1088 = vdwg.mxu0
  %v1089 = vmul.f32 %v1086, 0.001953125
  %v1090 = vmul.f32 %v1089, %v1089
  %v1092 = vrot.slane %v1090, 7
  %v1094 = vsub.f32 %v1089, %v1092
  %v1095 = vadd.f32 %v1094, 1e-05
  %v1096 = vrsqrt.pop %v1095
  %v1098 = vrot.slane %v1096, 1
  %v1100 = vmul.f32 %v499, %v1098
  %v1101 = vmul.f32 %v1089, %v1100
  %v1102 = vsub.f32 %v500, %v1101
  %v1104 = vrot.slane %v1102, 7
  %v1106 = vsel %vm98, %v1100, %v1104
  %v1108 = vsel %vm648, %v1106, 0
  %1110 = vmatprep.subr.mxu0 0.0
  %1111 = vmatpush1.msra.mxu0 0.0
  %1112 = vmatprep.subr.mxu0 0.0
  %1113 = vmatpush1.msra.mxu0 0.0
  %1114 = vmatprep.subr.mxu0 0.0
  %1115 = vmatpush1.msra.mxu0 0.0
  %1116 = vmatprep.subr.mxu0 0.0
  %1117 = vmatpush1.msra.mxu0 0.0
  %1118 = vmatprep.subr.mxu0 0.0
  %1119 = vmatpush1.msra.mxu0 0.0
  %1120 = vmatprep.subr.mxu0 0.0
  %1121 = vmatpush1.msra.mxu0 0.0
  %1122 = vmatprep.subr.mxu0 0.0
  %1123 = vmatpush1.msra.mxu0 0.0
  %1124 = vmatprep.subr.mxu0 0.0
  %1125 = vmatpush1.msra.mxu0 0.0
  %1126 = vmatprep.subr.mxu0 0.0
  %1127 = vmatpush1.msra.mxu0 0.0
  %1128 = vmatprep.subr.mxu0 0.0
  %1129 = vmatpush1.msra.mxu0 0.0
  %1130 = vmatprep.subr.mxu0 0.0
  %1131 = vmatpush1.msra.mxu0 0.0
  %1132 = vmatprep.subr.mxu0 0.0
  %1133 = vmatpush1.msra.mxu0 0.0
  %1134 = vmatprep.subr.mxu0 0.0
  %1135 = vmatpush1.msra.mxu0 0.0
  %1136 = vmatprep.subr.mxu0 0.0
  %1137 = vmatpush1.msra.mxu0 0.0
  %1138 = vmatprep.subr.mxu0 0.0
  %1139 = vmatpush1.msra.mxu0 0.0
  %1140 = vmatprep.subr.mxu0 0.0
  %1141 = vmatpush1.msra.mxu0 %v164
  %1142 = vmatprep.subr.mxu0 0.0
  %1143 = vmatpush2.msra.mxu0 0.0
  %1144 = vmatprep.subr.mxu0 0.0
  %1145 = vmatpush2.msra.mxu0 0.0
  %1146 = vmatprep.subr.mxu0 0.0
  %1147 = vmatpush2.msra.mxu0 0.0
  %1148 = vmatprep.subr.mxu0 0.0
  %1149 = vmatpush2.msra.mxu0 0.0
  %1150 = vmatprep.subr.mxu0 0.0
  %1151 = vmatpush2.msra.mxu0 0.0
  %1152 = vmatprep.subr.mxu0 0.0
  %1153 = vmatpush2.msra.mxu0 0.0
  %1154 = vmatprep.subr.mxu0 0.0
  %1155 = vmatpush2.msra.mxu0 0.0
  %1156 = vmatprep.subr.mxu0 0.0
  %1157 = vmatpush2.msra.mxu0 0.0
  %1158 = vmatprep.subr.mxu0 0.0
  %1159 = vmatpush2.msra.mxu0 0.0
  %1160 = vmatprep.subr.mxu0 0.0
  %1161 = vmatpush2.msra.mxu0 0.0
  %1162 = vmatprep.subr.mxu0 0.0
  %1163 = vmatpush2.msra.mxu0 0.0
  %1164 = vmatprep.subr.mxu0 0.0
  %1165 = vmatpush2.msra.mxu0 0.0
  %1166 = vmatprep.subr.mxu0 0.0
  %1167 = vmatpush2.msra.mxu0 0.0
  %1168 = vmatprep.subr.mxu0 0.0
  %1169 = vmatpush2.msra.mxu0 0.0
  %1170 = vmatprep.subr.mxu0 0.0
  %1171 = vmatpush2.msra.mxu0 0.0
  %1172 = vmatprep.subr.mxu0 0.0
  %1173 = vmatpush2.msra.mxu0 0.0
  %1174 = vmatprep.mubr.f32.mxu0 0.0
  %1175 = vmatmul.mubr.f32.gmra.mxu0 %v1108
  %v1176 = vpop.f32.mrf.mxu0
  %v1177 = vadd.f32 0.0, %v1176
  %v1178 = vpop.f32.mrf.mxu0
  %1179 = vdwg.mxu0
  %v1180 = vlaneseq
  %v1181 = vshrl.u32 %v1180, 7
  %v1182 = vsub.s32 0, %v1181
  %v1183 = vrot.slane %v1177, %v1182
  %v1184 = vmul.f32 %v978, %v1183
  %v1185 = vmul.f32 %v983, %v1183
  %v1186 = vmul.f32 %v988, %v1183
  %v1187 = vmul.f32 %v993, %v1183
  %v1188 = vlaneseq
  %v1189 = vshrl.u32 %v1188, 7
  %v1190 = vsub.s32 1, %v1189
  %v1191 = vrot.slane %v1177, %v1190
  %v1192 = vadd.f32 %v1184, %v1191
  %v1193 = vadd.f32 %v1185, %v1191
  %v1194 = vadd.f32 %v1186, %v1191
  %v1195 = vadd.f32 %v1187, %v1191
  %v1196 = vlaneseq
  %v1197 = vshrl.u32 %v1196, 7
  %v1198 = vsub.s32 1, %v1197
  %v1199 = vrot.slane %v719, %v1198
  %v1200 = vmul.f32 %v259, %v1199
  %v1201 = vmul.f32 %v265, %v1199
  %v1202 = vmul.f32 %v271, %v1199
  %v1203 = vmul.f32 %v277, %v1199
  %v1204 = vlaneseq
  %v1205 = vshrl.u32 %v1204, 7
  %v1206 = vsub.s32 3, %v1205
  %v1207 = vrot.slane %v719, %v1206
  %v1208 = vadd.f32 %v1200, %v1207
  %v1209 = vadd.f32 %v1201, %v1207
  %v1210 = vadd.f32 %v1202, %v1207
  %v1211 = vadd.f32 %v1203, %v1207
  %v1212 = vadd.f32 %v1192, %v1208
  %v1213 = vadd.f32 %v1193, %v1209
  %v1214 = vadd.f32 %v1194, %v1210
  %v1215 = vadd.f32 %v1195, %v1211
  %v1216 = vmax.f32 %v1212, 0.0
  %v1217 = vmax.f32 %v1213, 0.0
  %v1218 = vmax.f32 %v1214, 0.0
  %v1219 = vmax.f32 %v1215, 0.0
  %1220 = vst [vmem:[%s8] sm:$0xff] %v1216
  %1221 = vst [vmem:[%s8 + $0x8] sm:$0xff] %v1217
  %1222 = vst [vmem:[%s8 + $0x10] sm:$0xff] %v1218
  %1223 = vst [vmem:[%s8 + $0x18] sm:$0xff] %v1219
  // Predicated region
  $region34: #{residual_block_small.1} parent=0 // pred_check
    _
  $region35: #{residual_block_small.1} parent=0 // pred_check_branch
    %1225 = sbr.rel (0) target = $region37
  $region36: #{residual_block_small.1} parent=0 // pred_region
    _
  $region37: #{residual_block_small.1} parent=0 // pred_fallthru
    _
  // Predicated region
  $region38: #{residual_block_small.1} parent=0 // pred_check
    _
  $region39: #{residual_block_small.1} parent=0 // pred_check_branch
    %1227 = sbr.rel (0) target = $region41
  $region40: #{residual_block_small.1} parent=0 // pred_region
    _
  $region41: #{residual_block_small.1} parent=0 // pred_fallthru
    _

</llo_original>
